<compile_context>
chip_gen: v7x
topology: tpu7x:2x2x1
jax: 0.10.0
libtpu: 0.0.40
codegen_flags: <defaults>
</compile_context>

<pallas_src>
import functools

import jax
import jax.numpy as jnp
from jax.experimental import pallas as pl
from jax.experimental.pallas import tpu as pltpu


# ----------------------------------------------------------------------------
# Kernel
# ----------------------------------------------------------------------------
def _lstm_cell(gates, c, H):
    # Gates packed [i, f, o, g]: one contiguous sigmoid over 3H lanes,
    # tanh over the last H lanes.  All math in float32.
    sig = jax.nn.sigmoid(gates[:, : 3 * H])
    g = jnp.tanh(gates[:, 3 * H:])
    i = sig[:, :H]
    f = sig[:, H: 2 * H]
    o = sig[:, 2 * H: 3 * H]
    c_new = f * c + i * g
    h_new = o * jnp.tanh(c_new)
    return h_new, c_new


def _encoder_kernel(x_ref, wih1_ref, whh1_ref, b1_ref, w2_ref, b2_ref, out_ref,
                    *, split_layer2):
    seq_len = x_ref.shape[0]
    H1P = whh1_ref.shape[0]          # layer-1 hidden, padded to a 128-lane multiple
    H2 = out_ref.shape[-1]           # embedding_dim

    # Loop-invariant weight loads hoisted out of the recurrence.
    wih1 = wih1_ref[...]             # (1, 4*H1P)  f32   (VPU operand)
    b1 = b1_ref[...]                 # (1, 4*H1P)  f32
    whh1 = whh1_ref[...]             # (H1P, 4*H1P) bf16 (MXU operand)
    b2 = b2_ref[...]                 # (1, 4*H2)   f32
    if split_layer2:
        w_i2 = w2_ref[:H1P, :]       # (H1P, 4*H2) bf16
        w_h2 = w2_ref[H1P:, :]       # (H2,  4*H2) bf16
    else:
        w2 = w2_ref[...]             # (H1P + H2, 4*H2) bf16

    # Recurrent state lives in vregs (no VMEM scratch round trips).  Padded
    # lanes of h1/c1 provably stay zero (zero-padded weight columns/rows).
    h1 = jnp.zeros((1, H1P), jnp.float32)
    c1 = jnp.zeros((1, H1P), jnp.float32)
    h2 = jnp.zeros((1, H2), jnp.float32)
    c2 = jnp.zeros((1, H2), jnp.float32)

    # seq_len is small & static: fully-unrolled time loop, single basic block.
    for t in range(seq_len):
        # Layer 1: input projection is scalar (SMEM read) * vector on the VPU;
        # only the recurrent bf16 MXU push remains on the critical path.
        x_t = x_ref[t]
        gates1 = (x_t * wih1 + b1
                  + jnp.dot(h1.astype(jnp.bfloat16), whh1,
                            preferred_element_type=jnp.float32))
        h1, c1 = _lstm_cell(gates1, c1, H1P)

        # Layer 2.
        h1_b = h1.astype(jnp.bfloat16)
        h2_b = h2.astype(jnp.bfloat16)
        if split_layer2:
            # v7x: two accumulating pushes into the MRB, no concat rotate.
            gates2 = (jnp.dot(h1_b, w_i2, preferred_element_type=jnp.float32)
                      + jnp.dot(h2_b, w_h2, preferred_element_type=jnp.float32)
                      + b2)
        else:
            # v5e/v6e: one fused push of [h1_t, h2_{t-1}] @ [W_ih2; W_hh2].
            hcat = jnp.concatenate([h1_b, h2_b], axis=-1)
            gates2 = jnp.dot(hcat, w2, preferred_element_type=jnp.float32) + b2
        h2, c2 = _lstm_cell(gates2, c2, H2)

    out_ref[...] = h2


# ----------------------------------------------------------------------------
# Parameter packing: PyTorch layout -> kernel layout (call ONCE, not per step)
# ----------------------------------------------------------------------------
def _reorder_ifgo_to_ifog(w):
    """Reorder the last axis (4H gate columns) from [i,f,g,o] to [i,f,o,g]."""
    i, f, g, o = jnp.split(w, 4, axis=-1)
    return jnp.concatenate([i, f, o, g], axis=-1)


def _pad_gate_cols(w, h, hp):
    """Zero-pad each of the 4 gate blocks on the last axis from h to hp cols."""
    if h == hp:
        return w
    blocks = jnp.split(w, 4, axis=-1)
    pad = [(0, 0)] * (w.ndim - 1) + [(0, hp - h)]
    return jnp.concatenate([jnp.pad(b, pad) for b in blocks], axis=-1)


def pack_params(raw_params):
    """PyTorch-layout LSTM weights -> kernel-layout packed params.

    Returns:
      wih1 : (n_features, 4*H1P) f32   gate cols [i,f,o,g], gates padded to 128
      whh1 : (H1P, 4*H1P)        bf16  (rows zero-padded H1 -> H1P)
      b1   : (1, 4*H1P)          f32   (= b_ih1 + b_hh1)
      w2   : (H1P + H2, 4*H2)    bf16  rows = [W_ih2^T (padded); W_hh2^T]
      b2   : (1, 4*H2)           f32   (= b_ih2 + b_hh2)
    """
    (w_ih1, w_hh1, b_ih1, b_hh1, w_ih2, w_hh2, b_ih2, b_hh2) = raw_params
    f32, bf16 = jnp.float32, jnp.bfloat16
    H1 = w_hh1.shape[1]
    H2 = w_hh2.shape[1]
    H1P = -(-H1 // 128) * 128          # round up to a full vreg lane width

    # Layer 1: gate columns padded to H1P so i/f/o/g slices are vreg-aligned.
    wih1 = _pad_gate_cols(_reorder_ifgo_to_ifog(w_ih1.T.astype(f32)), H1, H1P)
    b1 = _pad_gate_cols(
        _reorder_ifgo_to_ifog((b_ih1 + b_hh1)[None, :].astype(f32)), H1, H1P)
    whh1 = _pad_gate_cols(_reorder_ifgo_to_ifog(w_hh1.T.astype(f32)), H1, H1P)
    whh1 = jnp.pad(whh1, ((0, H1P - H1), (0, 0))).astype(bf16)

    # Layer 2: gates NOT padded (4*H2 fits one vreg); input rows padded to H1P.
    w_i2 = jnp.pad(_reorder_ifgo_to_ifog(w_ih2.T.astype(f32)),
                   ((0, H1P - H1), (0, 0)))
    w_h2 = _reorder_ifgo_to_ifog(w_hh2.T.astype(f32))
    w2 = jnp.concatenate([w_i2, w_h2], axis=0).astype(bf16)
    b2 = _reorder_ifgo_to_ifog((b_ih2 + b_hh2)[None, :].astype(f32))
    return wih1, whh1, b1, w2, b2


# ----------------------------------------------------------------------------
# Wrapper
# ----------------------------------------------------------------------------
def _is_v7x():
    try:
        kind = jax.devices()[0].device_kind.lower()
        return ("v7" in kind) or ("7x" in kind)
    except Exception:
        return False


def encoder_forward(x, packed_params, *, seq_len, n_features, embedding_dim):
    """x: (seq_len*n_features,) or (seq_len, n_features); packed_params from pack_params().

    Returns (n_features, embedding_dim)."""
    assert n_features == 1, "final reshape requires n_features == 1"
    wih1, whh1, b1, w2, b2 = packed_params
    x1d = x.reshape(seq_len * n_features).astype(jnp.float32)

    split_layer2 = _is_v7x()   # two accumulating MXU pushes only on v7x (MRB)

    vmem = pl.BlockSpec(memory_space=pltpu.MemorySpace.VMEM)
    smem = pl.BlockSpec(memory_space=pltpu.MemorySpace.SMEM)
    out = pl.pallas_call(
        functools.partial(_encoder_kernel, split_layer2=split_layer2),
        out_shape=jax.ShapeDtypeStruct((1, embedding_dim), jnp.float32),
        in_specs=[smem, vmem, vmem, vmem, vmem, vmem],
        out_specs=vmem,
    )(x1d, wih1, whh1, b1, w2, b2)

    return out.reshape(n_features, embedding_dim)


# ----------------------------------------------------------------------------
# Deterministic parameter init (PyTorch-style uniform), PyTorch layout
# ----------------------------------------------------------------------------
def init_params(key, n_features, embedding_dim):
    hidden_dim = 2 * embedding_dim
    keys = jax.random.split(key, 8)

    def u(k, shape, bound):
        return jax.random.uniform(k, shape, jnp.float32, -bound, bound)

    b1v = 1.0 / jnp.sqrt(hidden_dim)
    b2v = 1.0 / jnp.sqrt(embedding_dim)

    # PyTorch: weight_ih (4H, in), weight_hh (4H, H), gate rows [i,f,g,o].
    w_ih1 = u(keys[0], (4 * hidden_dim, n_features), b1v)
    w_hh1 = u(keys[1], (4 * hidden_dim, hidden_dim), b1v)
    b_ih1 = u(keys[2], (4 * hidden_dim,), b1v)
    b_hh1 = u(keys[3], (4 * hidden_dim,), b1v)

    w_ih2 = u(keys[4], (4 * embedding_dim, hidden_dim), b2v)
    w_hh2 = u(keys[5], (4 * embedding_dim, embedding_dim), b2v)
    b_ih2 = u(keys[6], (4 * embedding_dim,), b2v)
    b_hh2 = u(keys[7], (4 * embedding_dim,), b2v)

    return (w_ih1, w_hh1, b_ih1, b_hh1, w_ih2, w_hh2, b_ih2, b_hh2)


# ----------------------------------------------------------------------------
# Pure-JAX reference (PyTorch gate order / layout), for correctness check
# ----------------------------------------------------------------------------
def encoder_reference(x, raw_params, *, seq_len, n_features, embedding_dim):
    hidden_dim = 2 * embedding_dim
    x2d = x.reshape(seq_len, n_features).astype(jnp.float32)
    (w_ih1, w_hh1, b_ih1, b_hh1, w_ih2, w_hh2, b_ih2, b_hh2) = raw_params

    def lstm_scan(xs, w_ih, w_hh, b_ih, b_hh, H):
        wih_t = w_ih.T
        whh_t = w_hh.T
        b = (b_ih + b_hh)[None, :]

        def step(carry, x_t):
            h, c = carry
            g = x_t[None, :] @ wih_t + h @ whh_t + b
            i = jax.nn.sigmoid(g[:, 0 * H:1 * H])
            f = jax.nn.sigmoid(g[:, 1 * H:2 * H])
            gg = jnp.tanh(g[:, 2 * H:3 * H])
            o = jax.nn.sigmoid(g[:, 3 * H:4 * H])
            c = f * c + i * gg
            h = o * jnp.tanh(c)
            return (h, c), h[0]

        init = (jnp.zeros((1, H), jnp.float32), jnp.zeros((1, H), jnp.float32))
        (h, _), ys = jax.lax.scan(step, init, xs)
        return ys, h

    ys1, _ = lstm_scan(x2d, w_ih1, w_hh1, b_ih1, b_hh1, hidden_dim)
    _, h_n = lstm_scan(ys1, w_ih2, w_hh2, b_ih2, b_hh2, embedding_dim)
    return h_n.reshape(n_features, embedding_dim)


if __name__ == "__main__":
    seq_len = 8
    n_features = 1          # required by the module's final reshape
    embedding_dim = 32

    key = jax.random.PRNGKey(0)
    kx, kp = jax.random.split(key)
    x = jax.random.normal(kx, (seq_len, n_features), jnp.float32)
    raw_params = init_params(kp, n_features, embedding_dim)

    # Pack ONCE at parameter-load time (hoisted out of the forward path).
    packed_params = jax.tree_util.tree_map(
        jax.block_until_ready, pack_params(raw_params))

    fwd = jax.jit(functools.partial(
        encoder_forward, seq_len=seq_len, n_features=n_features,
        embedding_dim=embedding_dim))
    out = fwd(x, packed_params)
    out = jax.block_until_ready(out)

    ref = encoder_reference(x, raw_params, seq_len=seq_len,
                            n_features=n_features, embedding_dim=embedding_dim)
    assert out.shape == (n_features, embedding_dim)
    # Tolerance relaxed vs the pure-f32 version: MXU operands are bf16.
    assert jnp.allclose(out, ref, atol=2e-2, rtol=2e-2), "mismatch vs JAX reference"

    print("KERNEL_OK")
</pallas_src>

<mosaic_0001>
module attributes {stable_mosaic.version = 11 : i64} {
  func.func @_encoder_kernel(%arg0: memref<8xf32, #tpu.memory_space<smem>>, %arg1: memref<1x512xf32, #tpu.memory_space<vmem>>, %arg2: memref<128x512xbf16, #tpu.memory_space<vmem>>, %arg3: memref<1x512xf32, #tpu.memory_space<vmem>>, %arg4: memref<160x128xbf16, #tpu.memory_space<vmem>>, %arg5: memref<1x128xf32, #tpu.memory_space<vmem>>, %arg6: memref<1x32xf32, #tpu.memory_space<vmem>>) attributes {dimension_semantics = [], scalar_prefetch = 0 : i64, scratch_operands = 0 : i64, tpu.core_type = #tpu.core_type<tc>} {
    %c0 = arith.constant 0 : index
    %c0_0 = arith.constant 0 : index
    %0 = vector.load %arg1[%c0, %c0_0] : memref<1x512xf32, #tpu.memory_space<vmem>>, vector<1x512xf32>
    %c0_1 = arith.constant 0 : index
    %c0_2 = arith.constant 0 : index
    %1 = vector.load %arg3[%c0_1, %c0_2] : memref<1x512xf32, #tpu.memory_space<vmem>>, vector<1x512xf32>
    %c0_3 = arith.constant 0 : index
    %c0_4 = arith.constant 0 : index
    %2 = vector.load %arg2[%c0_3, %c0_4] : memref<128x512xbf16, #tpu.memory_space<vmem>>, vector<128x512xbf16>
    %c0_5 = arith.constant 0 : index
    %c0_6 = arith.constant 0 : index
    %3 = vector.load %arg5[%c0_5, %c0_6] : memref<1x128xf32, #tpu.memory_space<vmem>>, vector<1x128xf32>
    %c0_7 = arith.constant 0 : index
    %c0_8 = arith.constant 0 : index
    %4 = vector.load %arg4[%c0_7, %c0_8] : memref<160x128xbf16, #tpu.memory_space<vmem>>, vector<160x128xbf16>
    %cst = arith.constant 0.000000e+00 : f32
    %5 = vector.broadcast %cst : f32 to vector<1x128xf32>
    %cst_9 = arith.constant 0.000000e+00 : f32
    %6 = vector.broadcast %cst_9 : f32 to vector<1x128xf32>
    %cst_10 = arith.constant 0.000000e+00 : f32
    %7 = vector.broadcast %cst_10 : f32 to vector<1x32xf32>
    %cst_11 = arith.constant 0.000000e+00 : f32
    %8 = vector.broadcast %cst_11 : f32 to vector<1x32xf32>
    %c0_12 = arith.constant 0 : index
    %9 = memref.load %arg0[%c0_12] : memref<8xf32, #tpu.memory_space<smem>>
    %10 = vector.broadcast %9 : f32 to vector<1x512xf32>
    %11 = arith.mulf %10, %0 : vector<1x512xf32>
    %12 = arith.addf %11, %1 : vector<1x512xf32>
    %13 = arith.truncf %5 : vector<1x128xf32> to vector<1x128xbf16>
    %cst_13 = arith.constant dense<0.000000e+00> : vector<1x512xf32>
    %14 = tpu.matmul %13, %2, %cst_13 {dimension_numbers = #tpu.dot_dimension_numbers<[1], [0], [0], [1], [0, 0, 1, 1], [], []>} : vector<1x128xbf16>, vector<128x512xbf16>, vector<1x512xf32> -> vector<1x512xf32>
    %15 = arith.addf %12, %14 : vector<1x512xf32>
    %16 = vector.extract_strided_slice %15 {offsets = [0, 0], sizes = [1, 384], strides = [1, 1]} : vector<1x512xf32> to vector<1x384xf32>
    %17 = arith.negf %16 : vector<1x384xf32>
    %18 = math.exp %17 : vector<1x384xf32>
    %cst_14 = arith.constant 1.000000e+00 : f32
    %19 = vector.broadcast %cst_14 : f32 to vector<1x384xf32>
    %20 = arith.addf %19, %18 : vector<1x384xf32>
    %21 = arith.divf %19, %20 : vector<1x384xf32>
    %22 = vector.extract_strided_slice %15 {offsets = [0, 384], sizes = [1, 128], strides = [1, 1]} : vector<1x512xf32> to vector<1x128xf32>
    %23 = math.tanh %22 : vector<1x128xf32>
    %24 = vector.extract_strided_slice %21 {offsets = [0, 0], sizes = [1, 128], strides = [1, 1]} : vector<1x384xf32> to vector<1x128xf32>
    %25 = vector.extract_strided_slice %21 {offsets = [0, 128], sizes = [1, 128], strides = [1, 1]} : vector<1x384xf32> to vector<1x128xf32>
    %26 = vector.extract_strided_slice %21 {offsets = [0, 256], sizes = [1, 128], strides = [1, 1]} : vector<1x384xf32> to vector<1x128xf32>
    %27 = arith.mulf %25, %6 : vector<1x128xf32>
    %28 = arith.mulf %24, %23 : vector<1x128xf32>
    %29 = arith.addf %27, %28 : vector<1x128xf32>
    %30 = math.tanh %29 : vector<1x128xf32>
    %31 = arith.mulf %26, %30 : vector<1x128xf32>
    %32 = arith.truncf %31 : vector<1x128xf32> to vector<1x128xbf16>
    %33 = arith.truncf %7 : vector<1x32xf32> to vector<1x32xbf16>
    %34 = tpu.concatenate %32, %33 in 1 : vector<1x128xbf16>, vector<1x32xbf16> -> vector<1x160xbf16>
    %cst_15 = arith.constant dense<0.000000e+00> : vector<1x128xf32>
    %35 = tpu.matmul %34, %4, %cst_15 {dimension_numbers = #tpu.dot_dimension_numbers<[1], [0], [0], [1], [0, 0, 1, 1], [], []>} : vector<1x160xbf16>, vector<160x128xbf16>, vector<1x128xf32> -> vector<1x128xf32>
    %36 = arith.addf %35, %3 : vector<1x128xf32>
    %37 = vector.extract_strided_slice %36 {offsets = [0, 0], sizes = [1, 96], strides = [1, 1]} : vector<1x128xf32> to vector<1x96xf32>
    %38 = arith.negf %37 : vector<1x96xf32>
    %39 = math.exp %38 : vector<1x96xf32>
    %cst_16 = arith.constant 1.000000e+00 : f32
    %40 = vector.broadcast %cst_16 : f32 to vector<1x96xf32>
    %41 = arith.addf %40, %39 : vector<1x96xf32>
    %42 = arith.divf %40, %41 : vector<1x96xf32>
    %43 = vector.extract_strided_slice %36 {offsets = [0, 96], sizes = [1, 32], strides = [1, 1]} : vector<1x128xf32> to vector<1x32xf32>
    %44 = math.tanh %43 : vector<1x32xf32>
    %45 = vector.extract_strided_slice %42 {offsets = [0, 0], sizes = [1, 32], strides = [1, 1]} : vector<1x96xf32> to vector<1x32xf32>
    %46 = vector.extract_strided_slice %42 {offsets = [0, 32], sizes = [1, 32], strides = [1, 1]} : vector<1x96xf32> to vector<1x32xf32>
    %47 = vector.extract_strided_slice %42 {offsets = [0, 64], sizes = [1, 32], strides = [1, 1]} : vector<1x96xf32> to vector<1x32xf32>
    %48 = arith.mulf %46, %8 : vector<1x32xf32>
    %49 = arith.mulf %45, %44 : vector<1x32xf32>
    %50 = arith.addf %48, %49 : vector<1x32xf32>
    %51 = math.tanh %50 : vector<1x32xf32>
    %52 = arith.mulf %47, %51 : vector<1x32xf32>
    %c1 = arith.constant 1 : index
    %53 = memref.load %arg0[%c1] : memref<8xf32, #tpu.memory_space<smem>>
    %54 = vector.broadcast %53 : f32 to vector<1x512xf32>
    %55 = arith.mulf %54, %0 : vector<1x512xf32>
    %56 = arith.addf %55, %1 : vector<1x512xf32>
    %57 = arith.truncf %31 : vector<1x128xf32> to vector<1x128xbf16>
    %cst_17 = arith.constant dense<0.000000e+00> : vector<1x512xf32>
    %58 = tpu.matmul %57, %2, %cst_17 {dimension_numbers = #tpu.dot_dimension_numbers<[1], [0], [0], [1], [0, 0, 1, 1], [], []>} : vector<1x128xbf16>, vector<128x512xbf16>, vector<1x512xf32> -> vector<1x512xf32>
    %59 = arith.addf %56, %58 : vector<1x512xf32>
    %60 = vector.extract_strided_slice %59 {offsets = [0, 0], sizes = [1, 384], strides = [1, 1]} : vector<1x512xf32> to vector<1x384xf32>
    %61 = arith.negf %60 : vector<1x384xf32>
    %62 = math.exp %61 : vector<1x384xf32>
    %cst_18 = arith.constant 1.000000e+00 : f32
    %63 = vector.broadcast %cst_18 : f32 to vector<1x384xf32>
    %64 = arith.addf %63, %62 : vector<1x384xf32>
    %65 = arith.divf %63, %64 : vector<1x384xf32>
    %66 = vector.extract_strided_slice %59 {offsets = [0, 384], sizes = [1, 128], strides = [1, 1]} : vector<1x512xf32> to vector<1x128xf32>
    %67 = math.tanh %66 : vector<1x128xf32>
    %68 = vector.extract_strided_slice %65 {offsets = [0, 0], sizes = [1, 128], strides = [1, 1]} : vector<1x384xf32> to vector<1x128xf32>
    %69 = vector.extract_strided_slice %65 {offsets = [0, 128], sizes = [1, 128], strides = [1, 1]} : vector<1x384xf32> to vector<1x128xf32>
    %70 = vector.extract_strided_slice %65 {offsets = [0, 256], sizes = [1, 128], strides = [1, 1]} : vector<1x384xf32> to vector<1x128xf32>
    %71 = arith.mulf %69, %29 : vector<1x128xf32>
    %72 = arith.mulf %68, %67 : vector<1x128xf32>
    %73 = arith.addf %71, %72 : vector<1x128xf32>
    %74 = math.tanh %73 : vector<1x128xf32>
    %75 = arith.mulf %70, %74 : vector<1x128xf32>
    %76 = arith.truncf %75 : vector<1x128xf32> to vector<1x128xbf16>
    %77 = arith.truncf %52 : vector<1x32xf32> to vector<1x32xbf16>
    %78 = tpu.concatenate %76, %77 in 1 : vector<1x128xbf16>, vector<1x32xbf16> -> vector<1x160xbf16>
    %cst_19 = arith.constant dense<0.000000e+00> : vector<1x128xf32>
    %79 = tpu.matmul %78, %4, %cst_19 {dimension_numbers = #tpu.dot_dimension_numbers<[1], [0], [0], [1], [0, 0, 1, 1], [], []>} : vector<1x160xbf16>, vector<160x128xbf16>, vector<1x128xf32> -> vector<1x128xf32>
    %80 = arith.addf %79, %3 : vector<1x128xf32>
    %81 = vector.extract_strided_slice %80 {offsets = [0, 0], sizes = [1, 96], strides = [1, 1]} : vector<1x128xf32> to vector<1x96xf32>
    %82 = arith.negf %81 : vector<1x96xf32>
    %83 = math.exp %82 : vector<1x96xf32>
    %cst_20 = arith.constant 1.000000e+00 : f32
    %84 = vector.broadcast %cst_20 : f32 to vector<1x96xf32>
    %85 = arith.addf %84, %83 : vector<1x96xf32>
    %86 = arith.divf %84, %85 : vector<1x96xf32>
    %87 = vector.extract_strided_slice %80 {offsets = [0, 96], sizes = [1, 32], strides = [1, 1]} : vector<1x128xf32> to vector<1x32xf32>
    %88 = math.tanh %87 : vector<1x32xf32>
    %89 = vector.extract_strided_slice %86 {offsets = [0, 0], sizes = [1, 32], strides = [1, 1]} : vector<1x96xf32> to vector<1x32xf32>
    %90 = vector.extract_strided_slice %86 {offsets = [0, 32], sizes = [1, 32], strides = [1, 1]} : vector<1x96xf32> to vector<1x32xf32>
    %91 = vector.extract_strided_slice %86 {offsets = [0, 64], sizes = [1, 32], strides = [1, 1]} : vector<1x96xf32> to vector<1x32xf32>
    %92 = arith.mulf %90, %50 : vector<1x32xf32>
    %93 = arith.mulf %89, %88 : vector<1x32xf32>
    %94 = arith.addf %92, %93 : vector<1x32xf32>
    %95 = math.tanh %94 : vector<1x32xf32>
    %96 = arith.mulf %91, %95 : vector<1x32xf32>
    %c2 = arith.constant 2 : index
    %97 = memref.load %arg0[%c2] : memref<8xf32, #tpu.memory_space<smem>>
    %98 = vector.broadcast %97 : f32 to vector<1x512xf32>
    %99 = arith.mulf %98, %0 : vector<1x512xf32>
    %100 = arith.addf %99, %1 : vector<1x512xf32>
    %101 = arith.truncf %75 : vector<1x128xf32> to vector<1x128xbf16>
    %cst_21 = arith.constant dense<0.000000e+00> : vector<1x512xf32>
    %102 = tpu.matmul %101, %2, %cst_21 {dimension_numbers = #tpu.dot_dimension_numbers<[1], [0], [0], [1], [0, 0, 1, 1], [], []>} : vector<1x128xbf16>, vector<128x512xbf16>, vector<1x512xf32> -> vector<1x512xf32>
    %103 = arith.addf %100, %102 : vector<1x512xf32>
    %104 = vector.extract_strided_slice %103 {offsets = [0, 0], sizes = [1, 384], strides = [1, 1]} : vector<1x512xf32> to vector<1x384xf32>
    %105 = arith.negf %104 : vector<1x384xf32>
    %106 = math.exp %105 : vector<1x384xf32>
    %cst_22 = arith.constant 1.000000e+00 : f32
    %107 = vector.broadcast %cst_22 : f32 to vector<1x384xf32>
    %108 = arith.addf %107, %106 : vector<1x384xf32>
    %109 = arith.divf %107, %108 : vector<1x384xf32>
    %110 = vector.extract_strided_slice %103 {offsets = [0, 384], sizes = [1, 128], strides = [1, 1]} : vector<1x512xf32> to vector<1x128xf32>
    %111 = math.tanh %110 : vector<1x128xf32>
    %112 = vector.extract_strided_slice %109 {offsets = [0, 0], sizes = [1, 128], strides = [1, 1]} : vector<1x384xf32> to vector<1x128xf32>
    %113 = vector.extract_strided_slice %109 {offsets = [0, 128], sizes = [1, 128], strides = [1, 1]} : vector<1x384xf32> to vector<1x128xf32>
    %114 = vector.extract_strided_slice %109 {offsets = [0, 256], sizes = [1, 128], strides = [1, 1]} : vector<1x384xf32> to vector<1x128xf32>
    %115 = arith.mulf %113, %73 : vector<1x128xf32>
    %116 = arith.mulf %112, %111 : vector<1x128xf32>
    %117 = arith.addf %115, %116 : vector<1x128xf32>
    %118 = math.tanh %117 : vector<1x128xf32>
    %119 = arith.mulf %114, %118 : vector<1x128xf32>
    %120 = arith.truncf %119 : vector<1x128xf32> to vector<1x128xbf16>
    %121 = arith.truncf %96 : vector<1x32xf32> to vector<1x32xbf16>
    %122 = tpu.concatenate %120, %121 in 1 : vector<1x128xbf16>, vector<1x32xbf16> -> vector<1x160xbf16>
    %cst_23 = arith.constant dense<0.000000e+00> : vector<1x128xf32>
    %123 = tpu.matmul %122, %4, %cst_23 {dimension_numbers = #tpu.dot_dimension_numbers<[1], [0], [0], [1], [0, 0, 1, 1], [], []>} : vector<1x160xbf16>, vector<160x128xbf16>, vector<1x128xf32> -> vector<1x128xf32>
    %124 = arith.addf %123, %3 : vector<1x128xf32>
    %125 = vector.extract_strided_slice %124 {offsets = [0, 0], sizes = [1, 96], strides = [1, 1]} : vector<1x128xf32> to vector<1x96xf32>
    %126 = arith.negf %125 : vector<1x96xf32>
    %127 = math.exp %126 : vector<1x96xf32>
    %cst_24 = arith.constant 1.000000e+00 : f32
    %128 = vector.broadcast %cst_24 : f32 to vector<1x96xf32>
    %129 = arith.addf %128, %127 : vector<1x96xf32>
    %130 = arith.divf %128, %129 : vector<1x96xf32>
    %131 = vector.extract_strided_slice %124 {offsets = [0, 96], sizes = [1, 32], strides = [1, 1]} : vector<1x128xf32> to vector<1x32xf32>
    %132 = math.tanh %131 : vector<1x32xf32>
    %133 = vector.extract_strided_slice %130 {offsets = [0, 0], sizes = [1, 32], strides = [1, 1]} : vector<1x96xf32> to vector<1x32xf32>
    %134 = vector.extract_strided_slice %130 {offsets = [0, 32], sizes = [1, 32], strides = [1, 1]} : vector<1x96xf32> to vector<1x32xf32>
    %135 = vector.extract_strided_slice %130 {offsets = [0, 64], sizes = [1, 32], strides = [1, 1]} : vector<1x96xf32> to vector<1x32xf32>
    %136 = arith.mulf %134, %94 : vector<1x32xf32>
    %137 = arith.mulf %133, %132 : vector<1x32xf32>
    %138 = arith.addf %136, %137 : vector<1x32xf32>
    %139 = math.tanh %138 : vector<1x32xf32>
    %140 = arith.mulf %135, %139 : vector<1x32xf32>
    %c3 = arith.constant 3 : index
    %141 = memref.load %arg0[%c3] : memref<8xf32, #tpu.memory_space<smem>>
    %142 = vector.broadcast %141 : f32 to vector<1x512xf32>
    %143 = arith.mulf %142, %0 : vector<1x512xf32>
    %144 = arith.addf %143, %1 : vector<1x512xf32>
    %145 = arith.truncf %119 : vector<1x128xf32> to vector<1x128xbf16>
    %cst_25 = arith.constant dense<0.000000e+00> : vector<1x512xf32>
    %146 = tpu.matmul %145, %2, %cst_25 {dimension_numbers = #tpu.dot_dimension_numbers<[1], [0], [0], [1], [0, 0, 1, 1], [], []>} : vector<1x128xbf16>, vector<128x512xbf16>, vector<1x512xf32> -> vector<1x512xf32>
    %147 = arith.addf %144, %146 : vector<1x512xf32>
    %148 = vector.extract_strided_slice %147 {offsets = [0, 0], sizes = [1, 384], strides = [1, 1]} : vector<1x512xf32> to vector<1x384xf32>
    %149 = arith.negf %148 : vector<1x384xf32>
    %150 = math.exp %149 : vector<1x384xf32>
    %cst_26 = arith.constant 1.000000e+00 : f32
    %151 = vector.broadcast %cst_26 : f32 to vector<1x384xf32>
    %152 = arith.addf %151, %150 : vector<1x384xf32>
    %153 = arith.divf %151, %152 : vector<1x384xf32>
    %154 = vector.extract_strided_slice %147 {offsets = [0, 384], sizes = [1, 128], strides = [1, 1]} : vector<1x512xf32> to vector<1x128xf32>
    %155 = math.tanh %154 : vector<1x128xf32>
    %156 = vector.extract_strided_slice %153 {offsets = [0, 0], sizes = [1, 128], strides = [1, 1]} : vector<1x384xf32> to vector<1x128xf32>
    %157 = vector.extract_strided_slice %153 {offsets = [0, 128], sizes = [1, 128], strides = [1, 1]} : vector<1x384xf32> to vector<1x128xf32>
    %158 = vector.extract_strided_slice %153 {offsets = [0, 256], sizes = [1, 128], strides = [1, 1]} : vector<1x384xf32> to vector<1x128xf32>
    %159 = arith.mulf %157, %117 : vector<1x128xf32>
    %160 = arith.mulf %156, %155 : vector<1x128xf32>
    %161 = arith.addf %159, %160 : vector<1x128xf32>
    %162 = math.tanh %161 : vector<1x128xf32>
    %163 = arith.mulf %158, %162 : vector<1x128xf32>
    %164 = arith.truncf %163 : vector<1x128xf32> to vector<1x128xbf16>
    %165 = arith.truncf %140 : vector<1x32xf32> to vector<1x32xbf16>
    %166 = tpu.concatenate %164, %165 in 1 : vector<1x128xbf16>, vector<1x32xbf16> -> vector<1x160xbf16>
    %cst_27 = arith.constant dense<0.000000e+00> : vector<1x128xf32>
    %167 = tpu.matmul %166, %4, %cst_27 {dimension_numbers = #tpu.dot_dimension_numbers<[1], [0], [0], [1], [0, 0, 1, 1], [], []>} : vector<1x160xbf16>, vector<160x128xbf16>, vector<1x128xf32> -> vector<1x128xf32>
    %168 = arith.addf %167, %3 : vector<1x128xf32>
    %169 = vector.extract_strided_slice %168 {offsets = [0, 0], sizes = [1, 96], strides = [1, 1]} : vector<1x128xf32> to vector<1x96xf32>
    %170 = arith.negf %169 : vector<1x96xf32>
    %171 = math.exp %170 : vector<1x96xf32>
    %cst_28 = arith.constant 1.000000e+00 : f32
    %172 = vector.broadcast %cst_28 : f32 to vector<1x96xf32>
    %173 = arith.addf %172, %171 : vector<1x96xf32>
    %174 = arith.divf %172, %173 : vector<1x96xf32>
    %175 = vector.extract_strided_slice %168 {offsets = [0, 96], sizes = [1, 32], strides = [1, 1]} : vector<1x128xf32> to vector<1x32xf32>
    %176 = math.tanh %175 : vector<1x32xf32>
    %177 = vector.extract_strided_slice %174 {offsets = [0, 0], sizes = [1, 32], strides = [1, 1]} : vector<1x96xf32> to vector<1x32xf32>
    %178 = vector.extract_strided_slice %174 {offsets = [0, 32], sizes = [1, 32], strides = [1, 1]} : vector<1x96xf32> to vector<1x32xf32>
    %179 = vector.extract_strided_slice %174 {offsets = [0, 64], sizes = [1, 32], strides = [1, 1]} : vector<1x96xf32> to vector<1x32xf32>
    %180 = arith.mulf %178, %138 : vector<1x32xf32>
    %181 = arith.mulf %177, %176 : vector<1x32xf32>
    %182 = arith.addf %180, %181 : vector<1x32xf32>
    %183 = math.tanh %182 : vector<1x32xf32>
    %184 = arith.mulf %179, %183 : vector<1x32xf32>
    %c4 = arith.constant 4 : index
    %185 = memref.load %arg0[%c4] : memref<8xf32, #tpu.memory_space<smem>>
    %186 = vector.broadcast %185 : f32 to vector<1x512xf32>
    %187 = arith.mulf %186, %0 : vector<1x512xf32>
    %188 = arith.addf %187, %1 : vector<1x512xf32>
    %189 = arith.truncf %163 : vector<1x128xf32> to vector<1x128xbf16>
    %cst_29 = arith.constant dense<0.000000e+00> : vector<1x512xf32>
    %190 = tpu.matmul %189, %2, %cst_29 {dimension_numbers = #tpu.dot_dimension_numbers<[1], [0], [0], [1], [0, 0, 1, 1], [], []>} : vector<1x128xbf16>, vector<128x512xbf16>, vector<1x512xf32> -> vector<1x512xf32>
    %191 = arith.addf %188, %190 : vector<1x512xf32>
    %192 = vector.extract_strided_slice %191 {offsets = [0, 0], sizes = [1, 384], strides = [1, 1]} : vector<1x512xf32> to vector<1x384xf32>
    %193 = arith.negf %192 : vector<1x384xf32>
    %194 = math.exp %193 : vector<1x384xf32>
    %cst_30 = arith.constant 1.000000e+00 : f32
    %195 = vector.broadcast %cst_30 : f32 to vector<1x384xf32>
    %196 = arith.addf %195, %194 : vector<1x384xf32>
    %197 = arith.divf %195, %196 : vector<1x384xf32>
    %198 = vector.extract_strided_slice %191 {offsets = [0, 384], sizes = [1, 128], strides = [1, 1]} : vector<1x512xf32> to vector<1x128xf32>
    %199 = math.tanh %198 : vector<1x128xf32>
    %200 = vector.extract_strided_slice %197 {offsets = [0, 0], sizes = [1, 128], strides = [1, 1]} : vector<1x384xf32> to vector<1x128xf32>
    %201 = vector.extract_strided_slice %197 {offsets = [0, 128], sizes = [1, 128], strides = [1, 1]} : vector<1x384xf32> to vector<1x128xf32>
    %202 = vector.extract_strided_slice %197 {offsets = [0, 256], sizes = [1, 128], strides = [1, 1]} : vector<1x384xf32> to vector<1x128xf32>
    %203 = arith.mulf %201, %161 : vector<1x128xf32>
    %204 = arith.mulf %200, %199 : vector<1x128xf32>
    %205 = arith.addf %203, %204 : vector<1x128xf32>
    %206 = math.tanh %205 : vector<1x128xf32>
    %207 = arith.mulf %202, %206 : vector<1x128xf32>
    %208 = arith.truncf %207 : vector<1x128xf32> to vector<1x128xbf16>
    %209 = arith.truncf %184 : vector<1x32xf32> to vector<1x32xbf16>
    %210 = tpu.concatenate %208, %209 in 1 : vector<1x128xbf16>, vector<1x32xbf16> -> vector<1x160xbf16>
    %cst_31 = arith.constant dense<0.000000e+00> : vector<1x128xf32>
    %211 = tpu.matmul %210, %4, %cst_31 {dimension_numbers = #tpu.dot_dimension_numbers<[1], [0], [0], [1], [0, 0, 1, 1], [], []>} : vector<1x160xbf16>, vector<160x128xbf16>, vector<1x128xf32> -> vector<1x128xf32>
    %212 = arith.addf %211, %3 : vector<1x128xf32>
    %213 = vector.extract_strided_slice %212 {offsets = [0, 0], sizes = [1, 96], strides = [1, 1]} : vector<1x128xf32> to vector<1x96xf32>
    %214 = arith.negf %213 : vector<1x96xf32>
    %215 = math.exp %214 : vector<1x96xf32>
    %cst_32 = arith.constant 1.000000e+00 : f32
    %216 = vector.broadcast %cst_32 : f32 to vector<1x96xf32>
    %217 = arith.addf %216, %215 : vector<1x96xf32>
    %218 = arith.divf %216, %217 : vector<1x96xf32>
    %219 = vector.extract_strided_slice %212 {offsets = [0, 96], sizes = [1, 32], strides = [1, 1]} : vector<1x128xf32> to vector<1x32xf32>
    %220 = math.tanh %219 : vector<1x32xf32>
    %221 = vector.extract_strided_slice %218 {offsets = [0, 0], sizes = [1, 32], strides = [1, 1]} : vector<1x96xf32> to vector<1x32xf32>
    %222 = vector.extract_strided_slice %218 {offsets = [0, 32], sizes = [1, 32], strides = [1, 1]} : vector<1x96xf32> to vector<1x32xf32>
    %223 = vector.extract_strided_slice %218 {offsets = [0, 64], sizes = [1, 32], strides = [1, 1]} : vector<1x96xf32> to vector<1x32xf32>
    %224 = arith.mulf %222, %182 : vector<1x32xf32>
    %225 = arith.mulf %221, %220 : vector<1x32xf32>
    %226 = arith.addf %224, %225 : vector<1x32xf32>
    %227 = math.tanh %226 : vector<1x32xf32>
    %228 = arith.mulf %223, %227 : vector<1x32xf32>
    %c5 = arith.constant 5 : index
    %229 = memref.load %arg0[%c5] : memref<8xf32, #tpu.memory_space<smem>>
    %230 = vector.broadcast %229 : f32 to vector<1x512xf32>
    %231 = arith.mulf %230, %0 : vector<1x512xf32>
    %232 = arith.addf %231, %1 : vector<1x512xf32>
    %233 = arith.truncf %207 : vector<1x128xf32> to vector<1x128xbf16>
    %cst_33 = arith.constant dense<0.000000e+00> : vector<1x512xf32>
    %234 = tpu.matmul %233, %2, %cst_33 {dimension_numbers = #tpu.dot_dimension_numbers<[1], [0], [0], [1], [0, 0, 1, 1], [], []>} : vector<1x128xbf16>, vector<128x512xbf16>, vector<1x512xf32> -> vector<1x512xf32>
    %235 = arith.addf %232, %234 : vector<1x512xf32>
    %236 = vector.extract_strided_slice %235 {offsets = [0, 0], sizes = [1, 384], strides = [1, 1]} : vector<1x512xf32> to vector<1x384xf32>
    %237 = arith.negf %236 : vector<1x384xf32>
    %238 = math.exp %237 : vector<1x384xf32>
    %cst_34 = arith.constant 1.000000e+00 : f32
    %239 = vector.broadcast %cst_34 : f32 to vector<1x384xf32>
    %240 = arith.addf %239, %238 : vector<1x384xf32>
    %241 = arith.divf %239, %240 : vector<1x384xf32>
    %242 = vector.extract_strided_slice %235 {offsets = [0, 384], sizes = [1, 128], strides = [1, 1]} : vector<1x512xf32> to vector<1x128xf32>
    %243 = math.tanh %242 : vector<1x128xf32>
    %244 = vector.extract_strided_slice %241 {offsets = [0, 0], sizes = [1, 128], strides = [1, 1]} : vector<1x384xf32> to vector<1x128xf32>
    %245 = vector.extract_strided_slice %241 {offsets = [0, 128], sizes = [1, 128], strides = [1, 1]} : vector<1x384xf32> to vector<1x128xf32>
    %246 = vector.extract_strided_slice %241 {offsets = [0, 256], sizes = [1, 128], strides = [1, 1]} : vector<1x384xf32> to vector<1x128xf32>
    %247 = arith.mulf %245, %205 : vector<1x128xf32>
    %248 = arith.mulf %244, %243 : vector<1x128xf32>
    %249 = arith.addf %247, %248 : vector<1x128xf32>
    %250 = math.tanh %249 : vector<1x128xf32>
    %251 = arith.mulf %246, %250 : vector<1x128xf32>
    %252 = arith.truncf %251 : vector<1x128xf32> to vector<1x128xbf16>
    %253 = arith.truncf %228 : vector<1x32xf32> to vector<1x32xbf16>
    %254 = tpu.concatenate %252, %253 in 1 : vector<1x128xbf16>, vector<1x32xbf16> -> vector<1x160xbf16>
    %cst_35 = arith.constant dense<0.000000e+00> : vector<1x128xf32>
    %255 = tpu.matmul %254, %4, %cst_35 {dimension_numbers = #tpu.dot_dimension_numbers<[1], [0], [0], [1], [0, 0, 1, 1], [], []>} : vector<1x160xbf16>, vector<160x128xbf16>, vector<1x128xf32> -> vector<1x128xf32>
    %256 = arith.addf %255, %3 : vector<1x128xf32>
    %257 = vector.extract_strided_slice %256 {offsets = [0, 0], sizes = [1, 96], strides = [1, 1]} : vector<1x128xf32> to vector<1x96xf32>
    %258 = arith.negf %257 : vector<1x96xf32>
    %259 = math.exp %258 : vector<1x96xf32>
    %cst_36 = arith.constant 1.000000e+00 : f32
    %260 = vector.broadcast %cst_36 : f32 to vector<1x96xf32>
    %261 = arith.addf %260, %259 : vector<1x96xf32>
    %262 = arith.divf %260, %261 : vector<1x96xf32>
    %263 = vector.extract_strided_slice %256 {offsets = [0, 96], sizes = [1, 32], strides = [1, 1]} : vector<1x128xf32> to vector<1x32xf32>
    %264 = math.tanh %263 : vector<1x32xf32>
    %265 = vector.extract_strided_slice %262 {offsets = [0, 0], sizes = [1, 32], strides = [1, 1]} : vector<1x96xf32> to vector<1x32xf32>
    %266 = vector.extract_strided_slice %262 {offsets = [0, 32], sizes = [1, 32], strides = [1, 1]} : vector<1x96xf32> to vector<1x32xf32>
    %267 = vector.extract_strided_slice %262 {offsets = [0, 64], sizes = [1, 32], strides = [1, 1]} : vector<1x96xf32> to vector<1x32xf32>
    %268 = arith.mulf %266, %226 : vector<1x32xf32>
    %269 = arith.mulf %265, %264 : vector<1x32xf32>
    %270 = arith.addf %268, %269 : vector<1x32xf32>
    %271 = math.tanh %270 : vector<1x32xf32>
    %272 = arith.mulf %267, %271 : vector<1x32xf32>
    %c6 = arith.constant 6 : index
    %273 = memref.load %arg0[%c6] : memref<8xf32, #tpu.memory_space<smem>>
    %274 = vector.broadcast %273 : f32 to vector<1x512xf32>
    %275 = arith.mulf %274, %0 : vector<1x512xf32>
    %276 = arith.addf %275, %1 : vector<1x512xf32>
    %277 = arith.truncf %251 : vector<1x128xf32> to vector<1x128xbf16>
    %cst_37 = arith.constant dense<0.000000e+00> : vector<1x512xf32>
    %278 = tpu.matmul %277, %2, %cst_37 {dimension_numbers = #tpu.dot_dimension_numbers<[1], [0], [0], [1], [0, 0, 1, 1], [], []>} : vector<1x128xbf16>, vector<128x512xbf16>, vector<1x512xf32> -> vector<1x512xf32>
    %279 = arith.addf %276, %278 : vector<1x512xf32>
    %280 = vector.extract_strided_slice %279 {offsets = [0, 0], sizes = [1, 384], strides = [1, 1]} : vector<1x512xf32> to vector<1x384xf32>
    %281 = arith.negf %280 : vector<1x384xf32>
    %282 = math.exp %281 : vector<1x384xf32>
    %cst_38 = arith.constant 1.000000e+00 : f32
    %283 = vector.broadcast %cst_38 : f32 to vector<1x384xf32>
    %284 = arith.addf %283, %282 : vector<1x384xf32>
    %285 = arith.divf %283, %284 : vector<1x384xf32>
    %286 = vector.extract_strided_slice %279 {offsets = [0, 384], sizes = [1, 128], strides = [1, 1]} : vector<1x512xf32> to vector<1x128xf32>
    %287 = math.tanh %286 : vector<1x128xf32>
    %288 = vector.extract_strided_slice %285 {offsets = [0, 0], sizes = [1, 128], strides = [1, 1]} : vector<1x384xf32> to vector<1x128xf32>
    %289 = vector.extract_strided_slice %285 {offsets = [0, 128], sizes = [1, 128], strides = [1, 1]} : vector<1x384xf32> to vector<1x128xf32>
    %290 = vector.extract_strided_slice %285 {offsets = [0, 256], sizes = [1, 128], strides = [1, 1]} : vector<1x384xf32> to vector<1x128xf32>
    %291 = arith.mulf %289, %249 : vector<1x128xf32>
    %292 = arith.mulf %288, %287 : vector<1x128xf32>
    %293 = arith.addf %291, %292 : vector<1x128xf32>
    %294 = math.tanh %293 : vector<1x128xf32>
    %295 = arith.mulf %290, %294 : vector<1x128xf32>
    %296 = arith.truncf %295 : vector<1x128xf32> to vector<1x128xbf16>
    %297 = arith.truncf %272 : vector<1x32xf32> to vector<1x32xbf16>
    %298 = tpu.concatenate %296, %297 in 1 : vector<1x128xbf16>, vector<1x32xbf16> -> vector<1x160xbf16>
    %cst_39 = arith.constant dense<0.000000e+00> : vector<1x128xf32>
    %299 = tpu.matmul %298, %4, %cst_39 {dimension_numbers = #tpu.dot_dimension_numbers<[1], [0], [0], [1], [0, 0, 1, 1], [], []>} : vector<1x160xbf16>, vector<160x128xbf16>, vector<1x128xf32> -> vector<1x128xf32>
    %300 = arith.addf %299, %3 : vector<1x128xf32>
    %301 = vector.extract_strided_slice %300 {offsets = [0, 0], sizes = [1, 96], strides = [1, 1]} : vector<1x128xf32> to vector<1x96xf32>
    %302 = arith.negf %301 : vector<1x96xf32>
    %303 = math.exp %302 : vector<1x96xf32>
    %cst_40 = arith.constant 1.000000e+00 : f32
    %304 = vector.broadcast %cst_40 : f32 to vector<1x96xf32>
    %305 = arith.addf %304, %303 : vector<1x96xf32>
    %306 = arith.divf %304, %305 : vector<1x96xf32>
    %307 = vector.extract_strided_slice %300 {offsets = [0, 96], sizes = [1, 32], strides = [1, 1]} : vector<1x128xf32> to vector<1x32xf32>
    %308 = math.tanh %307 : vector<1x32xf32>
    %309 = vector.extract_strided_slice %306 {offsets = [0, 0], sizes = [1, 32], strides = [1, 1]} : vector<1x96xf32> to vector<1x32xf32>
    %310 = vector.extract_strided_slice %306 {offsets = [0, 32], sizes = [1, 32], strides = [1, 1]} : vector<1x96xf32> to vector<1x32xf32>
    %311 = vector.extract_strided_slice %306 {offsets = [0, 64], sizes = [1, 32], strides = [1, 1]} : vector<1x96xf32> to vector<1x32xf32>
    %312 = arith.mulf %310, %270 : vector<1x32xf32>
    %313 = arith.mulf %309, %308 : vector<1x32xf32>
    %314 = arith.addf %312, %313 : vector<1x32xf32>
    %315 = math.tanh %314 : vector<1x32xf32>
    %316 = arith.mulf %311, %315 : vector<1x32xf32>
    %c7 = arith.constant 7 : index
    %317 = memref.load %arg0[%c7] : memref<8xf32, #tpu.memory_space<smem>>
    %318 = vector.broadcast %317 : f32 to vector<1x512xf32>
    %319 = arith.mulf %318, %0 : vector<1x512xf32>
    %320 = arith.addf %319, %1 : vector<1x512xf32>
    %321 = arith.truncf %295 : vector<1x128xf32> to vector<1x128xbf16>
    %cst_41 = arith.constant dense<0.000000e+00> : vector<1x512xf32>
    %322 = tpu.matmul %321, %2, %cst_41 {dimension_numbers = #tpu.dot_dimension_numbers<[1], [0], [0], [1], [0, 0, 1, 1], [], []>} : vector<1x128xbf16>, vector<128x512xbf16>, vector<1x512xf32> -> vector<1x512xf32>
    %323 = arith.addf %320, %322 : vector<1x512xf32>
    %324 = vector.extract_strided_slice %323 {offsets = [0, 0], sizes = [1, 384], strides = [1, 1]} : vector<1x512xf32> to vector<1x384xf32>
    %325 = arith.negf %324 : vector<1x384xf32>
    %326 = math.exp %325 : vector<1x384xf32>
    %cst_42 = arith.constant 1.000000e+00 : f32
    %327 = vector.broadcast %cst_42 : f32 to vector<1x384xf32>
    %328 = arith.addf %327, %326 : vector<1x384xf32>
    %329 = arith.divf %327, %328 : vector<1x384xf32>
    %330 = vector.extract_strided_slice %323 {offsets = [0, 384], sizes = [1, 128], strides = [1, 1]} : vector<1x512xf32> to vector<1x128xf32>
    %331 = math.tanh %330 : vector<1x128xf32>
    %332 = vector.extract_strided_slice %329 {offsets = [0, 0], sizes = [1, 128], strides = [1, 1]} : vector<1x384xf32> to vector<1x128xf32>
    %333 = vector.extract_strided_slice %329 {offsets = [0, 128], sizes = [1, 128], strides = [1, 1]} : vector<1x384xf32> to vector<1x128xf32>
    %334 = vector.extract_strided_slice %329 {offsets = [0, 256], sizes = [1, 128], strides = [1, 1]} : vector<1x384xf32> to vector<1x128xf32>
    %335 = arith.mulf %333, %293 : vector<1x128xf32>
    %336 = arith.mulf %332, %331 : vector<1x128xf32>
    %337 = arith.addf %335, %336 : vector<1x128xf32>
    %338 = math.tanh %337 : vector<1x128xf32>
    %339 = arith.mulf %334, %338 : vector<1x128xf32>
    %340 = arith.truncf %339 : vector<1x128xf32> to vector<1x128xbf16>
    %341 = arith.truncf %316 : vector<1x32xf32> to vector<1x32xbf16>
    %342 = tpu.concatenate %340, %341 in 1 : vector<1x128xbf16>, vector<1x32xbf16> -> vector<1x160xbf16>
    %cst_43 = arith.constant dense<0.000000e+00> : vector<1x128xf32>
    %343 = tpu.matmul %342, %4, %cst_43 {dimension_numbers = #tpu.dot_dimension_numbers<[1], [0], [0], [1], [0, 0, 1, 1], [], []>} : vector<1x160xbf16>, vector<160x128xbf16>, vector<1x128xf32> -> vector<1x128xf32>
    %344 = arith.addf %343, %3 : vector<1x128xf32>
    %345 = vector.extract_strided_slice %344 {offsets = [0, 0], sizes = [1, 96], strides = [1, 1]} : vector<1x128xf32> to vector<1x96xf32>
    %346 = arith.negf %345 : vector<1x96xf32>
    %347 = math.exp %346 : vector<1x96xf32>
    %cst_44 = arith.constant 1.000000e+00 : f32
    %348 = vector.broadcast %cst_44 : f32 to vector<1x96xf32>
    %349 = arith.addf %348, %347 : vector<1x96xf32>
    %350 = arith.divf %348, %349 : vector<1x96xf32>
    %351 = vector.extract_strided_slice %344 {offsets = [0, 96], sizes = [1, 32], strides = [1, 1]} : vector<1x128xf32> to vector<1x32xf32>
    %352 = math.tanh %351 : vector<1x32xf32>
    %353 = vector.extract_strided_slice %350 {offsets = [0, 0], sizes = [1, 32], strides = [1, 1]} : vector<1x96xf32> to vector<1x32xf32>
    %354 = vector.extract_strided_slice %350 {offsets = [0, 32], sizes = [1, 32], strides = [1, 1]} : vector<1x96xf32> to vector<1x32xf32>
    %355 = vector.extract_strided_slice %350 {offsets = [0, 64], sizes = [1, 32], strides = [1, 1]} : vector<1x96xf32> to vector<1x32xf32>
    %356 = arith.mulf %354, %314 : vector<1x32xf32>
    %357 = arith.mulf %353, %352 : vector<1x32xf32>
    %358 = arith.addf %356, %357 : vector<1x32xf32>
    %359 = math.tanh %358 : vector<1x32xf32>
    %360 = arith.mulf %355, %359 : vector<1x32xf32>
    %c0_45 = arith.constant 0 : index
    %c0_46 = arith.constant 0 : index
    %361 = vector.load %arg6[%c0_45, %c0_46] : memref<1x32xf32, #tpu.memory_space<vmem>>, vector<1x32xf32>
    tpu.vector_store %arg6[%c0_45, %c0_46], %360 {strides = array<i32>} : memref<1x32xf32, #tpu.memory_space<vmem>>, vector<1x32xf32>,
    return
  }
}

</mosaic_0001>

<llo_original>
// kernel: encoder_forward.1
$region0: #{encoder_forward.1}
  #allocation0 [shape = 'u32[]', space=smem, size = 0x4, offset = 0x4, fixed_abs, tag = 'smem constant byte address 0x4 - core index']
  #allocation1 [shape = 'u32[144,128]{1,0:T(1,128)}', space=vmem, size = 0x12000, scoped, tag = 'internal scratch']
  %s0 = inlined_call_operand.vmem [shape: f32[8], index: 0, kind: input, shape index: {}]
  %s1 = inlined_call_operand.vmem [shape: f32[1,512], index: 1, kind: input, shape index: {}]
  %s2 = inlined_call_operand.hbm [shape: bf16[128,512], index: 2, kind: input, shape index: {}]
  %s3 = inlined_call_operand.vmem [shape: f32[1,512], index: 3, kind: input, shape index: {}]
  %s4 = inlined_call_operand.hbm [shape: bf16[160,128], index: 4, kind: input, shape index: {}]
  %s5 = inlined_call_operand.vmem [shape: f32[1,128], index: 5, kind: input, shape index: {}]
  %s6 = inlined_call_operand.hbm [shape: f32[1,32], index: 6, kind: output, shape index: {}]
  %s7 = sld [smem:[#allocation0]]
  $region46: #{encoder_forward.1} parent=0
    _
  %s9 = ssub.s32 1, %s7
  %s10 = scalar_select 0, %s9, %s7
  $region1: #{encoder_forward.1} parent=0
    #allocation2 [shape = 'u8[512]{0}', space=smem, size = 0x200, scoped, tag = 'input window, operand 0, single buffered']
    #allocation3 [shape = 's32[1]{0}', space=sflag, size = 0x4, scoped, tag = 'scoped memory for encoder_forward.1']
    #allocation4 [shape = 's32[1]{0}', space=sflag, size = 0x4, scoped, tag = 'scoped memory for encoder_forward.1']
    #allocation5 [shape = 's32[1]{0}', space=sflag, size = 0x4, scoped, tag = 'scoped memory for encoder_forward.1']
    #allocation6 [shape = 'u8[131072]{0}', space=vmem, size = 0x20000, scoped, tag = 'input window, operand 2, single buffered']
    #allocation7 [shape = 'u8[40960]{0}', space=vmem, size = 0xa000, scoped, tag = 'input window, operand 4, single buffered']
    #allocation8 [shape = 's32[1]{0}', space=sflag, size = 0x4, scoped, tag = 'scoped memory for encoder_forward.1']
    #allocation9 [shape = 'u8[512]{0}', space=vmem, size = 0x400, scoped, tag = 'output window, operand 0, single buffered']
    %11 = vsyncpa [#allocation5], 0
    %12 = vsyncpa [#allocation3], 0
    %13 = vsyncpa [#allocation8], 0
    %14 = vsyncpa [#allocation4], 0
    // Predicated region
    $region2: #{encoder_forward.1} parent=1 // pred_check
      _
    $region3: #{encoder_forward.1} parent=1 // pred_check_branch
      %16 = sbr.rel (0) target = $region5
    $region4: #{encoder_forward.1} parent=1 // pred_region
      %s18 = ssub.s32 16, 16
      %19 = vsyncadd [#allocation5], %s18
      %s21 = sshll.u32 %s0, 4
      %s22 = int_to_ptr.vmem [resolvable:$true] %s21
      %24 = dma.vmem_to_smem %s22, 16, [#allocation2], [#allocation5]
    $region5: #{encoder_forward.1} parent=1 // pred_fallthru
      _
    // Predicated region
    $region6: #{encoder_forward.1} parent=1 // pred_check
      _
    $region7: #{encoder_forward.1} parent=1 // pred_check_branch
      %26 = sbr.rel (0) target = $region9
    $region8: #{encoder_forward.1} parent=1 // pred_region
      _
    $region9: #{encoder_forward.1} parent=1 // pred_fallthru
      _
    // Predicated region
    $region10: #{encoder_forward.1} parent=1 // pred_check
      _
    $region11: #{encoder_forward.1} parent=1 // pred_check_branch
      %28 = sbr.rel (0) target = $region13
    $region12: #{encoder_forward.1} parent=1 // pred_region
      %s30 = ssub.s32 4096, 4096
      %31 = vsyncadd [#allocation3], %s30
      %s32 = sshll.u32 [#allocation6], 4
      %s33 = int_to_ptr.vmem [resolvable:$true] %s32
      %38 = dma.hbm_to_vmem [thread:$0]  %s2, 4096, %s33, [#allocation3], 256, 256, 16
    $region13: #{encoder_forward.1} parent=1 // pred_fallthru
      _
    // Predicated region
    $region14: #{encoder_forward.1} parent=1 // pred_check
      _
    $region15: #{encoder_forward.1} parent=1 // pred_check_branch
      %40 = sbr.rel (0) target = $region17
    $region16: #{encoder_forward.1} parent=1 // pred_region
      _
    $region17: #{encoder_forward.1} parent=1 // pred_fallthru
      _
    // Predicated region
    $region18: #{encoder_forward.1} parent=1 // pred_check
      _
    $region19: #{encoder_forward.1} parent=1 // pred_check_branch
      %42 = sbr.rel (0) target = $region21
    $region20: #{encoder_forward.1} parent=1 // pred_region
      %s44 = ssub.s32 1280, 1280
      %45 = vsyncadd [#allocation8], %s44
      %s46 = sshll.u32 [#allocation7], 4
      %s47 = int_to_ptr.vmem [resolvable:$true] %s46
      %52 = dma.hbm_to_vmem [thread:$0]  %s4, 1280, %s47, [#allocation8], 64, 64, 4
    $region21: #{encoder_forward.1} parent=1 // pred_fallthru
      _
    // Predicated region
    $region22: #{encoder_forward.1} parent=1 // pred_check
      _
    $region23: #{encoder_forward.1} parent=1 // pred_check_branch
      %54 = sbr.rel (0) target = $region25
    $region24: #{encoder_forward.1} parent=1 // pred_region
      _
    $region25: #{encoder_forward.1} parent=1 // pred_fallthru
      _
    // Predicated region
    $region26: #{encoder_forward.1} parent=1 // pred_check
      _
    $region27: #{encoder_forward.1} parent=1 // pred_check_branch
      %56 = sbr.rel (0) target = $region29
    $region28: #{encoder_forward.1} parent=1 // pred_region
      %57 = dma.done [#allocation5], 16
    $region29: #{encoder_forward.1} parent=1 // pred_fallthru
      _
    // Predicated region
    $region30: #{encoder_forward.1} parent=1 // pred_check
      _
    $region31: #{encoder_forward.1} parent=1 // pred_check_branch
      %59 = sbr.rel (0) target = $region33
    $region32: #{encoder_forward.1} parent=1 // pred_region
      %60 = dma.done [#allocation3], 4096
    $region33: #{encoder_forward.1} parent=1 // pred_fallthru
      _
    // Predicated region
    $region34: #{encoder_forward.1} parent=1 // pred_check
      _
    $region35: #{encoder_forward.1} parent=1 // pred_check_branch
      %62 = sbr.rel (0) target = $region37
    $region36: #{encoder_forward.1} parent=1 // pred_region
      %63 = dma.done [#allocation8], 1280
    $region37: #{encoder_forward.1} parent=1 // pred_fallthru
      _
    %64 = sfence
    %v66 = vld [vmem:[%s1] sm:$0xf]
    %v67 = vld [vmem:[%s3] sm:$0xf]
    %v68 = vld [vmem:[#allocation6] sm:$0xff]
    %v69 = vld [vmem:[#allocation6 + $0x8] sm:$0xff]
    %v70 = vld [vmem:[#allocation6 + $0x10] sm:$0xff]
    %v71 = vld [vmem:[#allocation6 + $0x18] sm:$0xff]
    %v72 = vld [vmem:[#allocation6 + $0x20] sm:$0xff]
    %v73 = vld [vmem:[#allocation6 + $0x28] sm:$0xff]
    %v74 = vld [vmem:[#allocation6 + $0x30] sm:$0xff]
    %v75 = vld [vmem:[#allocation6 + $0x38] sm:$0xff]
    %v76 = vld [vmem:[#allocation6 + $0x40] sm:$0xff]
    %v77 = vld [vmem:[#allocation6 + $0x48] sm:$0xff]
    %v78 = vld [vmem:[#allocation6 + $0x50] sm:$0xff]
    %v79 = vld [vmem:[#allocation6 + $0x58] sm:$0xff]
    %v80 = vld [vmem:[#allocation6 + $0x60] sm:$0xff]
    %v81 = vld [vmem:[#allocation6 + $0x68] sm:$0xff]
    %v82 = vld [vmem:[#allocation6 + $0x70] sm:$0xff]
    %v83 = vld [vmem:[#allocation6 + $0x78] sm:$0xff]
    %v84 = vld [vmem:[#allocation6 + $0x80] sm:$0xff]
    %v85 = vld [vmem:[#allocation6 + $0x88] sm:$0xff]
    %v86 = vld [vmem:[#allocation6 + $0x90] sm:$0xff]
    %v87 = vld [vmem:[#allocation6 + $0x98] sm:$0xff]
    %v88 = vld [vmem:[#allocation6 + $0xa0] sm:$0xff]
    %v89 = vld [vmem:[#allocation6 + $0xa8] sm:$0xff]
    %v90 = vld [vmem:[#allocation6 + $0xb0] sm:$0xff]
    %v91 = vld [vmem:[#allocation6 + $0xb8] sm:$0xff]
    %v92 = vld [vmem:[#allocation6 + $0xc0] sm:$0xff]
    %v93 = vld [vmem:[#allocation6 + $0xc8] sm:$0xff]
    %v94 = vld [vmem:[#allocation6 + $0xd0] sm:$0xff]
    %v95 = vld [vmem:[#allocation6 + $0xd8] sm:$0xff]
    %v96 = vld [vmem:[#allocation6 + $0xe0] sm:$0xff]
    %v97 = vld [vmem:[#allocation6 + $0xe8] sm:$0xff]
    %v98 = vld [vmem:[#allocation6 + $0xf0] sm:$0xff]
    %v99 = vld [vmem:[#allocation6 + $0xf8] sm:$0xff]
    %v100 = vld [vmem:[%s5] sm:$0x1]
    %v101 = vld [vmem:[#allocation7] sm:$0xf]
    %v102 = vld [vmem:[#allocation7 + $0x4] sm:$0xf]
    %v103 = vld [vmem:[#allocation7 + $0x8] sm:$0xf]
    %v104 = vld [vmem:[#allocation7 + $0xc] sm:$0xf]
    %v105 = vld [vmem:[#allocation7 + $0x10] sm:$0xf]
    %v106 = vld [vmem:[#allocation7 + $0x14] sm:$0xf]
    %v107 = vld [vmem:[#allocation7 + $0x18] sm:$0xf]
    %v108 = vld [vmem:[#allocation7 + $0x1c] sm:$0xf]
    %v109 = vld [vmem:[#allocation7 + $0x20] sm:$0xf]
    %v110 = vld [vmem:[#allocation7 + $0x24] sm:$0xf]
    %v111 = vld [vmem:[#allocation7 + $0x28] sm:$0xf]
    %v112 = vld [vmem:[#allocation7 + $0x2c] sm:$0xf]
    %v113 = vld [vmem:[#allocation7 + $0x30] sm:$0xf]
    %v114 = vld [vmem:[#allocation7 + $0x34] sm:$0xf]
    %v115 = vld [vmem:[#allocation7 + $0x38] sm:$0xf]
    %v116 = vld [vmem:[#allocation7 + $0x3c] sm:$0xf]
    %v117 = vld [vmem:[#allocation7 + $0x40] sm:$0xf]
    %v118 = vld [vmem:[#allocation7 + $0x44] sm:$0xf]
    %v119 = vld [vmem:[#allocation7 + $0x48] sm:$0xf]
    %v120 = vld [vmem:[#allocation7 + $0x4c] sm:$0xf]
    %s121 = sld [smem:[#allocation2]]
    %v122 = vstv %s121
    %v123 = vmul.f32 %v122, %v66
    %v124 = vadd.f32 %v123, %v67
    %v157 = vunpack.c.l.b16 %v68
    %v158 = vunpack.c.h.b16 %v68
    %v159 = vunpack.c.l.b16 %v69
    %v160 = vunpack.c.h.b16 %v69
    %v161 = vunpack.c.l.b16 %v70
    %v162 = vunpack.c.h.b16 %v70
    %v163 = vunpack.c.l.b16 %v71
    %v164 = vunpack.c.h.b16 %v71
    %v165 = vunpack.c.l.b16 %v72
    %v166 = vunpack.c.h.b16 %v72
    %v167 = vunpack.c.l.b16 %v73
    %v168 = vunpack.c.h.b16 %v73
    %v169 = vunpack.c.l.b16 %v74
    %v170 = vunpack.c.h.b16 %v74
    %v171 = vunpack.c.l.b16 %v75
    %v172 = vunpack.c.h.b16 %v75
    %v173 = vunpack.c.l.b16 %v76
    %v174 = vunpack.c.h.b16 %v76
    %v175 = vunpack.c.l.b16 %v77
    %v176 = vunpack.c.h.b16 %v77
    %v177 = vunpack.c.l.b16 %v78
    %v178 = vunpack.c.h.b16 %v78
    %v179 = vunpack.c.l.b16 %v79
    %v180 = vunpack.c.h.b16 %v79
    %v181 = vunpack.c.l.b16 %v80
    %v182 = vunpack.c.h.b16 %v80
    %v183 = vunpack.c.l.b16 %v81
    %v184 = vunpack.c.h.b16 %v81
    %v185 = vunpack.c.l.b16 %v82
    %v186 = vunpack.c.h.b16 %v82
    %v187 = vunpack.c.l.b16 %v83
    %v188 = vunpack.c.h.b16 %v83
    %v189 = vunpack.c.l.b16 %v84
    %v190 = vunpack.c.h.b16 %v84
    %v191 = vunpack.c.l.b16 %v85
    %v192 = vunpack.c.h.b16 %v85
    %v193 = vunpack.c.l.b16 %v86
    %v194 = vunpack.c.h.b16 %v86
    %v195 = vunpack.c.l.b16 %v87
    %v196 = vunpack.c.h.b16 %v87
    %v197 = vunpack.c.l.b16 %v88
    %v198 = vunpack.c.h.b16 %v88
    %v199 = vunpack.c.l.b16 %v89
    %v200 = vunpack.c.h.b16 %v89
    %v201 = vunpack.c.l.b16 %v90
    %v202 = vunpack.c.h.b16 %v90
    %v203 = vunpack.c.l.b16 %v91
    %v204 = vunpack.c.h.b16 %v91
    %v205 = vunpack.c.l.b16 %v92
    %v206 = vunpack.c.h.b16 %v92
    %v207 = vunpack.c.l.b16 %v93
    %v208 = vunpack.c.h.b16 %v93
    %v209 = vunpack.c.l.b16 %v94
    %v210 = vunpack.c.h.b16 %v94
    %v211 = vunpack.c.l.b16 %v95
    %v212 = vunpack.c.h.b16 %v95
    %v213 = vunpack.c.l.b16 %v96
    %v214 = vunpack.c.h.b16 %v96
    %v215 = vunpack.c.l.b16 %v97
    %v216 = vunpack.c.h.b16 %v97
    %v217 = vunpack.c.l.b16 %v98
    %v218 = vunpack.c.h.b16 %v98
    %v219 = vunpack.c.l.b16 %v99
    %v220 = vunpack.c.h.b16 %v99
    %v221 = vpack.c.b16 %v161, %v157
    %v222 = vpack.c.b16 %v162, %v158
    %v223 = vpack.c.b16 %v163, %v159
    %v224 = vpack.c.b16 %v164, %v160
    %v225 = vpack.c.b16 %v169, %v165
    %v226 = vpack.c.b16 %v170, %v166
    %v227 = vpack.c.b16 %v171, %v167
    %v228 = vpack.c.b16 %v172, %v168
    %v229 = vpack.c.b16 %v177, %v173
    %v230 = vpack.c.b16 %v178, %v174
    %v231 = vpack.c.b16 %v179, %v175
    %v232 = vpack.c.b16 %v180, %v176
    %v233 = vpack.c.b16 %v185, %v181
    %v234 = vpack.c.b16 %v186, %v182
    %v235 = vpack.c.b16 %v187, %v183
    %v236 = vpack.c.b16 %v188, %v184
    %v237 = vpack.c.b16 %v193, %v189
    %v238 = vpack.c.b16 %v194, %v190
    %v239 = vpack.c.b16 %v195, %v191
    %v240 = vpack.c.b16 %v196, %v192
    %v241 = vpack.c.b16 %v201, %v197
    %v242 = vpack.c.b16 %v202, %v198
    %v243 = vpack.c.b16 %v203, %v199
    %v244 = vpack.c.b16 %v204, %v200
    %v245 = vpack.c.b16 %v209, %v205
    %v246 = vpack.c.b16 %v210, %v206
    %v247 = vpack.c.b16 %v211, %v207
    %v248 = vpack.c.b16 %v212, %v208
    %v249 = vpack.c.b16 %v217, %v213
    %v250 = vpack.c.b16 %v218, %v214
    %v251 = vpack.c.b16 %v219, %v215
    %v252 = vpack.c.b16 %v220, %v216
    %285 = vmatprep.subr.bf16.mxu0 %v222
    %286 = vmatpush1.bf16.msra.mxu0 %v221
    %287 = vmatprep.subr.bf16.mxu0 %v226
    %288 = vmatpush1.bf16.msra.mxu0 %v225
    %289 = vmatprep.subr.bf16.mxu0 %v230
    %290 = vmatpush1.bf16.msra.mxu0 %v229
    %291 = vmatprep.subr.bf16.mxu0 %v234
    %292 = vmatpush1.bf16.msra.mxu0 %v233
    %293 = vmatprep.subr.bf16.mxu0 %v238
    %294 = vmatpush1.bf16.msra.mxu0 %v237
    %295 = vmatprep.subr.bf16.mxu0 %v242
    %296 = vmatpush1.bf16.msra.mxu0 %v241
    %297 = vmatprep.subr.bf16.mxu0 %v246
    %298 = vmatpush1.bf16.msra.mxu0 %v245
    %299 = vmatprep.subr.bf16.mxu0 %v250
    %300 = vmatpush1.bf16.msra.mxu0 %v249
    %301 = vmatprep.subr.bf16.mxu0 0
    %302 = vmatpush1.bf16.msra.mxu0 0
    %303 = vmatprep.subr.bf16.mxu0 0
    %304 = vmatpush1.bf16.msra.mxu0 0
    %305 = vmatprep.subr.bf16.mxu0 0
    %306 = vmatpush1.bf16.msra.mxu0 0
    %307 = vmatprep.subr.bf16.mxu0 0
    %308 = vmatpush1.bf16.msra.mxu0 0
    %309 = vmatprep.subr.bf16.mxu0 0
    %310 = vmatpush1.bf16.msra.mxu0 0
    %311 = vmatprep.subr.bf16.mxu0 0
    %312 = vmatpush1.bf16.msra.mxu0 0
    %313 = vmatprep.subr.bf16.mxu0 0
    %314 = vmatpush1.bf16.msra.mxu0 0
    %315 = vmatprep.subr.bf16.mxu0 0
    %316 = vmatpush1.bf16.msra.mxu0 0
    %317 = vmatprep.mubr.bf16.mxu0 0
    %318 = vmatmul.mubr.bf16.gmra.mrb[0].mxu0 0
    %v319 = vpop.f32.mrb[0].mxu0
    %v320 = vadd.f32 0.0, %v319
    %v321 = vpop.f32.mrb[0].mxu0
    %v322 = vadd.f32 0.0, %v321
    %v323 = vpop.f32.mrb[0].mxu0
    %v324 = vpop.f32.mrb[0].mxu0
    %325 = vdwg.mxu0
    %326 = vmatprep.subr.bf16.mxu0 %v224
    %327 = vmatpush1.bf16.msra.mxu0 %v223
    %328 = vmatprep.subr.bf16.mxu0 %v228
    %329 = vmatpush1.bf16.msra.mxu0 %v227
    %330 = vmatprep.subr.bf16.mxu0 %v232
    %331 = vmatpush1.bf16.msra.mxu0 %v231
    %332 = vmatprep.subr.bf16.mxu0 %v236
    %333 = vmatpush1.bf16.msra.mxu0 %v235
    %334 = vmatprep.subr.bf16.mxu0 %v240
    %335 = vmatpush1.bf16.msra.mxu0 %v239
    %336 = vmatprep.subr.bf16.mxu0 %v244
    %337 = vmatpush1.bf16.msra.mxu0 %v243
    %338 = vmatprep.subr.bf16.mxu0 %v248
    %339 = vmatpush1.bf16.msra.mxu0 %v247
    %340 = vmatprep.subr.bf16.mxu0 %v252
    %341 = vmatpush1.bf16.msra.mxu0 %v251
    %342 = vmatprep.subr.bf16.mxu0 0
    %343 = vmatpush1.bf16.msra.mxu0 0
    %344 = vmatprep.subr.bf16.mxu0 0
    %345 = vmatpush1.bf16.msra.mxu0 0
    %346 = vmatprep.subr.bf16.mxu0 0
    %347 = vmatpush1.bf16.msra.mxu0 0
    %348 = vmatprep.subr.bf16.mxu0 0
    %349 = vmatpush1.bf16.msra.mxu0 0
    %350 = vmatprep.subr.bf16.mxu0 0
    %351 = vmatpush1.bf16.msra.mxu0 0
    %352 = vmatprep.subr.bf16.mxu0 0
    %353 = vmatpush1.bf16.msra.mxu0 0
    %354 = vmatprep.subr.bf16.mxu0 0
    %355 = vmatpush1.bf16.msra.mxu0 0
    %356 = vmatprep.subr.bf16.mxu0 0
    %357 = vmatpush1.bf16.msra.mxu0 0
    %358 = vmatprep.mubr.bf16.mxu0 0
    %359 = vmatmul.mubr.bf16.gmra.mrb[0].mxu0 0
    %v360 = vpop.f32.mrb[0].mxu0
    %v361 = vadd.f32 0.0, %v360
    %v362 = vpop.f32.mrb[0].mxu0
    %v363 = vadd.f32 0.0, %v362
    %v364 = vpop.f32.mrb[0].mxu0
    %v365 = vpop.f32.mrb[0].mxu0
    %366 = vdwg.mxu0
    %v371 = vcombine.low %v320, %v322
    %v372 = vcombine.low %v361, %v363
    %v374 = vunpack.c.l.s4 1966171168
    %v375 = vunpack.c.0.s8 %v374
    %v376 = vlaneseq
    %v377 = vshrl.u32 %v376, 7
    %v378 = vsub.s32 %v375, %v377
    %v379 = vrot.slane %v371, %v378
    %v381 = vunpack.c.l.s4 1966171168
    %v382 = vunpack.c.0.s8 %v381
    %v383 = vlaneseq
    %v384 = vshrl.u32 %v383, 7
    %v385 = vsub.s32 %v382, %v384
    %v386 = vrot.slane %v372, %v385
    %v387 = vcombine.low %v379, %v386
    %v389 = vunpack.c.l.s4 1966171168
    %v390 = vunpack.c.0.s8 %v389
    %v391 = vlaneseq
    %v392 = vshrl.u32 %v391, 7
    %v393 = vsub.s32 %v390, %v392
    %v394 = vrot.slane %v387, %v393
    %v396 = vadd.f32 %v124, %v394
    %v397 = vxor.u32 %v396, 2147483648
    %v398 = vmul.f32 %v397, 1.442695
    %v399 = vpow.pop %v398
    %v400 = vadd.f32 %v399, 1.0
    %v401 = vrcp.pop %v400
    %v402 = vmul.f32 1.0, %v401
    %v404 = vrot.slane %v396, 3
    %v406 = vtanh.pop %v404
    %v408 = vrot.slane %v402, 1
    %v410 = vmul.f32 %v408, 0.0
    %v411 = vmul.f32 %v402, %v406
    %v412 = vadd.f32 %v410, %v411
    %v413 = vtanh.pop %v412
    %v414 = vrot.slane %v402, 2
    %v416 = vmul.f32 %v414, %v413
    %v417 = vpack.c.bf16 %v416, %v416
    %v438 = vunpack.c.l.b16 %v101
    %v439 = vunpack.c.l.b16 %v102
    %v440 = vunpack.c.l.b16 %v103
    %v441 = vunpack.c.l.b16 %v104
    %v442 = vunpack.c.l.b16 %v105
    %v443 = vunpack.c.l.b16 %v106
    %v444 = vunpack.c.l.b16 %v107
    %v445 = vunpack.c.l.b16 %v108
    %v446 = vunpack.c.l.b16 %v109
    %v447 = vunpack.c.l.b16 %v110
    %v448 = vunpack.c.l.b16 %v111
    %v449 = vunpack.c.l.b16 %v112
    %v450 = vunpack.c.l.b16 %v113
    %v451 = vunpack.c.l.b16 %v114
    %v452 = vunpack.c.l.b16 %v115
    %v453 = vunpack.c.l.b16 %v116
    %v454 = vunpack.c.l.b16 %v117
    %v455 = vunpack.c.l.b16 %v118
    %v456 = vunpack.c.l.b16 %v119
    %v457 = vunpack.c.l.b16 %v120
    %v458 = vpack.c.b16 %v439, %v438
    %v459 = vpack.c.b16 %v441, %v440
    %v460 = vpack.c.b16 %v443, %v442
    %v461 = vpack.c.b16 %v445, %v444
    %v462 = vpack.c.b16 %v447, %v446
    %v463 = vpack.c.b16 %v449, %v448
    %v464 = vpack.c.b16 %v451, %v450
    %v465 = vpack.c.b16 %v453, %v452
    %v466 = vpack.c.b16 %v455, %v454
    %v467 = vpack.c.b16 %v457, %v456
    %vm478 = vcmask 261120
    %v480 = vsel %vm478, 0, 0
    %482 = vmatprep.subr.bf16.mxu0 0
    %483 = vmatpush1.bf16.msra.mxu0 %v458
    %484 = vmatprep.subr.bf16.mxu0 0
    %485 = vmatpush1.bf16.msra.mxu0 %v459
    %486 = vmatprep.subr.bf16.mxu0 0
    %487 = vmatpush1.bf16.msra.mxu0 %v460
    %488 = vmatprep.subr.bf16.mxu0 0
    %489 = vmatpush1.bf16.msra.mxu0 %v461
    %490 = vmatprep.subr.bf16.mxu0 0
    %491 = vmatpush1.bf16.msra.mxu0 %v462
    %492 = vmatprep.subr.bf16.mxu0 0
    %493 = vmatpush1.bf16.msra.mxu0 %v463
    %494 = vmatprep.subr.bf16.mxu0 0
    %495 = vmatpush1.bf16.msra.mxu0 %v464
    %496 = vmatprep.subr.bf16.mxu0 0
    %497 = vmatpush1.bf16.msra.mxu0 %v465
    %498 = vmatprep.subr.bf16.mxu0 0
    %499 = vmatpush1.bf16.msra.mxu0 %v466
    %500 = vmatprep.subr.bf16.mxu0 0
    %501 = vmatpush1.bf16.msra.mxu0 %v467
    %502 = vmatprep.subr.bf16.mxu0 0
    %503 = vmatpush1.bf16.msra.mxu0 0
    %504 = vmatprep.subr.bf16.mxu0 0
    %505 = vmatpush1.bf16.msra.mxu0 0
    %506 = vmatprep.subr.bf16.mxu0 0
    %507 = vmatpush1.bf16.msra.mxu0 0
    %508 = vmatprep.subr.bf16.mxu0 0
    %509 = vmatpush1.bf16.msra.mxu0 0
    %510 = vmatprep.subr.bf16.mxu0 0
    %511 = vmatpush1.bf16.msra.mxu0 0
    %512 = vmatprep.subr.bf16.mxu0 0
    %513 = vmatpush1.bf16.msra.mxu0 0
    %514 = vmatprep.mubr.bf16.mxu0 %v480
    %515 = vmatmul.mubr.bf16.gmra.mrb[0].mxu0 %v417
    %v516 = vpop.f32.mrb[0].mxu0
    %v517 = vadd.f32 %v100, %v516
    %v518 = vpop.f32.mrb[0].mxu0
    %v519 = vpop.f32.mrb[0].mxu0
    %v520 = vpop.f32.mrb[0].mxu0
    %521 = vdwg.mxu0
    %v522 = vxor.u32 %v517, 2147483648
    %v523 = vmul.f32 %v522, 1.442695
    %v524 = vpow.pop %v523
    %v525 = vadd.f32 %v524, 1.0
    %v526 = vrcp.pop %v525
    %v527 = vmul.f32 1.0, %v526
    %v528 = vtanh.pop %v517
    %v529 = vmul.f32 %v527, 0.0
    %531 = vrot.lane.b32.xlu0 %v528, 32
    %v532 = vpop.permute.xlu0 %531
    %v534 = vmul.f32 %v527, %v532
    %536 = vrot.lane.b32.xlu0 %v534, 32
    %v537 = vpop.permute.xlu0 %536
    %v539 = vadd.f32 %v529, %v537
    %v540 = vtanh.pop %v539
    %542 = vrot.lane.b32.xlu0 %v540, 32
    %v543 = vpop.permute.xlu0 %542
    %v545 = vmul.f32 %v527, %v543
    %s546 = sld [smem:[#allocation2 + $0x1]]
    %v547 = vstv %s546
    %v548 = vmul.f32 %v547, %v66
    %v549 = vadd.f32 %v548, %v67
    %550 = vmatprep.subr.bf16.mxu0 %v222
    %551 = vmatpush1.bf16.msra.mxu0 %v221
    %552 = vmatprep.subr.bf16.mxu0 %v226
    %553 = vmatpush1.bf16.msra.mxu0 %v225
    %554 = vmatprep.subr.bf16.mxu0 %v230
    %555 = vmatpush1.bf16.msra.mxu0 %v229
    %556 = vmatprep.subr.bf16.mxu0 %v234
    %557 = vmatpush1.bf16.msra.mxu0 %v233
    %558 = vmatprep.subr.bf16.mxu0 %v238
    %559 = vmatpush1.bf16.msra.mxu0 %v237
    %560 = vmatprep.subr.bf16.mxu0 %v242
    %561 = vmatpush1.bf16.msra.mxu0 %v241
    %562 = vmatprep.subr.bf16.mxu0 %v246
    %563 = vmatpush1.bf16.msra.mxu0 %v245
    %564 = vmatprep.subr.bf16.mxu0 %v250
    %565 = vmatpush1.bf16.msra.mxu0 %v249
    %566 = vmatprep.subr.bf16.mxu0 0
    %567 = vmatpush1.bf16.msra.mxu0 0
    %568 = vmatprep.subr.bf16.mxu0 0
    %569 = vmatpush1.bf16.msra.mxu0 0
    %570 = vmatprep.subr.bf16.mxu0 0
    %571 = vmatpush1.bf16.msra.mxu0 0
    %572 = vmatprep.subr.bf16.mxu0 0
    %573 = vmatpush1.bf16.msra.mxu0 0
    %574 = vmatprep.subr.bf16.mxu0 0
    %575 = vmatpush1.bf16.msra.mxu0 0
    %576 = vmatprep.subr.bf16.mxu0 0
    %577 = vmatpush1.bf16.msra.mxu0 0
    %578 = vmatprep.subr.bf16.mxu0 0
    %579 = vmatpush1.bf16.msra.mxu0 0
    %580 = vmatprep.subr.bf16.mxu0 0
    %581 = vmatpush1.bf16.msra.mxu0 0
    %582 = vmatprep.mubr.bf16.mxu0 0
    %583 = vmatmul.mubr.bf16.gmra.mrb[0].mxu0 %v417
    %v584 = vpop.f32.mrb[0].mxu0
    %v585 = vadd.f32 0.0, %v584
    %v586 = vpop.f32.mrb[0].mxu0
    %v587 = vadd.f32 0.0, %v586
    %v588 = vpop.f32.mrb[0].mxu0
    %v589 = vpop.f32.mrb[0].mxu0
    %590 = vdwg.mxu0
    %591 = vmatprep.subr.bf16.mxu0 %v224
    %592 = vmatpush1.bf16.msra.mxu0 %v223
    %593 = vmatprep.subr.bf16.mxu0 %v228
    %594 = vmatpush1.bf16.msra.mxu0 %v227
    %595 = vmatprep.subr.bf16.mxu0 %v232
    %596 = vmatpush1.bf16.msra.mxu0 %v231
    %597 = vmatprep.subr.bf16.mxu0 %v236
    %598 = vmatpush1.bf16.msra.mxu0 %v235
    %599 = vmatprep.subr.bf16.mxu0 %v240
    %600 = vmatpush1.bf16.msra.mxu0 %v239
    %601 = vmatprep.subr.bf16.mxu0 %v244
    %602 = vmatpush1.bf16.msra.mxu0 %v243
    %603 = vmatprep.subr.bf16.mxu0 %v248
    %604 = vmatpush1.bf16.msra.mxu0 %v247
    %605 = vmatprep.subr.bf16.mxu0 %v252
    %606 = vmatpush1.bf16.msra.mxu0 %v251
    %607 = vmatprep.subr.bf16.mxu0 0
    %608 = vmatpush1.bf16.msra.mxu0 0
    %609 = vmatprep.subr.bf16.mxu0 0
    %610 = vmatpush1.bf16.msra.mxu0 0
    %611 = vmatprep.subr.bf16.mxu0 0
    %612 = vmatpush1.bf16.msra.mxu0 0
    %613 = vmatprep.subr.bf16.mxu0 0
    %614 = vmatpush1.bf16.msra.mxu0 0
    %615 = vmatprep.subr.bf16.mxu0 0
    %616 = vmatpush1.bf16.msra.mxu0 0
    %617 = vmatprep.subr.bf16.mxu0 0
    %618 = vmatpush1.bf16.msra.mxu0 0
    %619 = vmatprep.subr.bf16.mxu0 0
    %620 = vmatpush1.bf16.msra.mxu0 0
    %621 = vmatprep.subr.bf16.mxu0 0
    %622 = vmatpush1.bf16.msra.mxu0 0
    %623 = vmatprep.mubr.bf16.mxu0 0
    %624 = vmatmul.mubr.bf16.gmra.mrb[0].mxu0 %v417
    %v625 = vpop.f32.mrb[0].mxu0
    %v626 = vadd.f32 0.0, %v625
    %v627 = vpop.f32.mrb[0].mxu0
    %v628 = vadd.f32 0.0, %v627
    %v629 = vpop.f32.mrb[0].mxu0
    %v630 = vpop.f32.mrb[0].mxu0
    %631 = vdwg.mxu0
    %v636 = vcombine.low %v585, %v587
    %v637 = vcombine.low %v626, %v628
    %v639 = vunpack.c.l.s4 1966171168
    %v640 = vunpack.c.0.s8 %v639
    %v641 = vlaneseq
    %v642 = vshrl.u32 %v641, 7
    %v643 = vsub.s32 %v640, %v642
    %v644 = vrot.slane %v636, %v643
    %v646 = vunpack.c.l.s4 1966171168
    %v647 = vunpack.c.0.s8 %v646
    %v648 = vlaneseq
    %v649 = vshrl.u32 %v648, 7
    %v650 = vsub.s32 %v647, %v649
    %v651 = vrot.slane %v637, %v650
    %v652 = vcombine.low %v644, %v651
    %v654 = vunpack.c.l.s4 1966171168
    %v655 = vunpack.c.0.s8 %v654
    %v656 = vlaneseq
    %v657 = vshrl.u32 %v656, 7
    %v658 = vsub.s32 %v655, %v657
    %v659 = vrot.slane %v652, %v658
    %v661 = vadd.f32 %v549, %v659
    %v662 = vxor.u32 %v661, 2147483648
    %v663 = vmul.f32 %v662, 1.442695
    %v664 = vpow.pop %v663
    %v665 = vadd.f32 %v664, 1.0
    %v666 = vrcp.pop %v665
    %v667 = vmul.f32 1.0, %v666
    %v669 = vrot.slane %v661, 3
    %v671 = vtanh.pop %v669
    %v673 = vrot.slane %v667, 1
    %v675 = vmul.f32 %v673, %v412
    %v676 = vmul.f32 %v667, %v671
    %v677 = vadd.f32 %v675, %v676
    %v678 = vtanh.pop %v677
    %v679 = vrot.slane %v667, 2
    %v681 = vmul.f32 %v679, %v678
    %v682 = vpack.c.bf16 %v681, %v681
    %v683 = vpack.c.bf16 %v545, %v545
    %685 = vrot.lane.b32.xlu0 %v683, 64
    %v686 = vpop.permute.xlu0 %685
    %v688 = vsel %vm478, %v686, 0
    %690 = vmatprep.subr.bf16.mxu0 0
    %691 = vmatpush1.bf16.msra.mxu0 %v458
    %692 = vmatprep.subr.bf16.mxu0 0
    %693 = vmatpush1.bf16.msra.mxu0 %v459
    %694 = vmatprep.subr.bf16.mxu0 0
    %695 = vmatpush1.bf16.msra.mxu0 %v460
    %696 = vmatprep.subr.bf16.mxu0 0
    %697 = vmatpush1.bf16.msra.mxu0 %v461
    %698 = vmatprep.subr.bf16.mxu0 0
    %699 = vmatpush1.bf16.msra.mxu0 %v462
    %700 = vmatprep.subr.bf16.mxu0 0
    %701 = vmatpush1.bf16.msra.mxu0 %v463
    %702 = vmatprep.subr.bf16.mxu0 0
    %703 = vmatpush1.bf16.msra.mxu0 %v464
    %704 = vmatprep.subr.bf16.mxu0 0
    %705 = vmatpush1.bf16.msra.mxu0 %v465
    %706 = vmatprep.subr.bf16.mxu0 0
    %707 = vmatpush1.bf16.msra.mxu0 %v466
    %708 = vmatprep.subr.bf16.mxu0 0
    %709 = vmatpush1.bf16.msra.mxu0 %v467
    %710 = vmatprep.subr.bf16.mxu0 0
    %711 = vmatpush1.bf16.msra.mxu0 0
    %712 = vmatprep.subr.bf16.mxu0 0
    %713 = vmatpush1.bf16.msra.mxu0 0
    %714 = vmatprep.subr.bf16.mxu0 0
    %715 = vmatpush1.bf16.msra.mxu0 0
    %716 = vmatprep.subr.bf16.mxu0 0
    %717 = vmatpush1.bf16.msra.mxu0 0
    %718 = vmatprep.subr.bf16.mxu0 0
    %719 = vmatpush1.bf16.msra.mxu0 0
    %720 = vmatprep.subr.bf16.mxu0 0
    %721 = vmatpush1.bf16.msra.mxu0 0
    %722 = vmatprep.mubr.bf16.mxu0 %v688
    %723 = vmatmul.mubr.bf16.gmra.mrb[0].mxu0 %v682
    %v724 = vpop.f32.mrb[0].mxu0
    %v725 = vadd.f32 %v100, %v724
    %v726 = vpop.f32.mrb[0].mxu0
    %v727 = vpop.f32.mrb[0].mxu0
    %v728 = vpop.f32.mrb[0].mxu0
    %729 = vdwg.mxu0
    %v730 = vxor.u32 %v725, 2147483648
    %v731 = vmul.f32 %v730, 1.442695
    %v732 = vpow.pop %v731
    %v733 = vadd.f32 %v732, 1.0
    %v734 = vrcp.pop %v733
    %v735 = vmul.f32 1.0, %v734
    %v736 = vtanh.pop %v725
    %v737 = vmul.f32 %v735, %v539
    %739 = vrot.lane.b32.xlu0 %v736, 32
    %v740 = vpop.permute.xlu0 %739
    %v742 = vmul.f32 %v735, %v740
    %744 = vrot.lane.b32.xlu0 %v742, 32
    %v745 = vpop.permute.xlu0 %744
    %v747 = vadd.f32 %v737, %v745
    %v748 = vtanh.pop %v747
    %750 = vrot.lane.b32.xlu0 %v748, 32
    %v751 = vpop.permute.xlu0 %750
    %v753 = vmul.f32 %v735, %v751
    %s754 = sld [smem:[#allocation2 + $0x2]]
    %v755 = vstv %s754
    %v756 = vmul.f32 %v755, %v66
    %v757 = vadd.f32 %v756, %v67
    %758 = vmatprep.subr.bf16.mxu0 %v222
    %759 = vmatpush1.bf16.msra.mxu0 %v221
    %760 = vmatprep.subr.bf16.mxu0 %v226
    %761 = vmatpush1.bf16.msra.mxu0 %v225
    %762 = vmatprep.subr.bf16.mxu0 %v230
    %763 = vmatpush1.bf16.msra.mxu0 %v229
    %764 = vmatprep.subr.bf16.mxu0 %v234
    %765 = vmatpush1.bf16.msra.mxu0 %v233
    %766 = vmatprep.subr.bf16.mxu0 %v238
    %767 = vmatpush1.bf16.msra.mxu0 %v237
    %768 = vmatprep.subr.bf16.mxu0 %v242
    %769 = vmatpush1.bf16.msra.mxu0 %v241
    %770 = vmatprep.subr.bf16.mxu0 %v246
    %771 = vmatpush1.bf16.msra.mxu0 %v245
    %772 = vmatprep.subr.bf16.mxu0 %v250
    %773 = vmatpush1.bf16.msra.mxu0 %v249
    %774 = vmatprep.subr.bf16.mxu0 0
    %775 = vmatpush1.bf16.msra.mxu0 0
    %776 = vmatprep.subr.bf16.mxu0 0
    %777 = vmatpush1.bf16.msra.mxu0 0
    %778 = vmatprep.subr.bf16.mxu0 0
    %779 = vmatpush1.bf16.msra.mxu0 0
    %780 = vmatprep.subr.bf16.mxu0 0
    %781 = vmatpush1.bf16.msra.mxu0 0
    %782 = vmatprep.subr.bf16.mxu0 0
    %783 = vmatpush1.bf16.msra.mxu0 0
    %784 = vmatprep.subr.bf16.mxu0 0
    %785 = vmatpush1.bf16.msra.mxu0 0
    %786 = vmatprep.subr.bf16.mxu0 0
    %787 = vmatpush1.bf16.msra.mxu0 0
    %788 = vmatprep.subr.bf16.mxu0 0
    %789 = vmatpush1.bf16.msra.mxu0 0
    %790 = vmatprep.mubr.bf16.mxu0 0
    %791 = vmatmul.mubr.bf16.gmra.mrb[0].mxu0 %v682
    %v792 = vpop.f32.mrb[0].mxu0
    %v793 = vadd.f32 0.0, %v792
    %v794 = vpop.f32.mrb[0].mxu0
    %v795 = vadd.f32 0.0, %v794
    %v796 = vpop.f32.mrb[0].mxu0
    %v797 = vpop.f32.mrb[0].mxu0
    %798 = vdwg.mxu0
    %799 = vmatprep.subr.bf16.mxu0 %v224
    %800 = vmatpush1.bf16.msra.mxu0 %v223
    %801 = vmatprep.subr.bf16.mxu0 %v228
    %802 = vmatpush1.bf16.msra.mxu0 %v227
    %803 = vmatprep.subr.bf16.mxu0 %v232
    %804 = vmatpush1.bf16.msra.mxu0 %v231
    %805 = vmatprep.subr.bf16.mxu0 %v236
    %806 = vmatpush1.bf16.msra.mxu0 %v235
    %807 = vmatprep.subr.bf16.mxu0 %v240
    %808 = vmatpush1.bf16.msra.mxu0 %v239
    %809 = vmatprep.subr.bf16.mxu0 %v244
    %810 = vmatpush1.bf16.msra.mxu0 %v243
    %811 = vmatprep.subr.bf16.mxu0 %v248
    %812 = vmatpush1.bf16.msra.mxu0 %v247
    %813 = vmatprep.subr.bf16.mxu0 %v252
    %814 = vmatpush1.bf16.msra.mxu0 %v251
    %815 = vmatprep.subr.bf16.mxu0 0
    %816 = vmatpush1.bf16.msra.mxu0 0
    %817 = vmatprep.subr.bf16.mxu0 0
    %818 = vmatpush1.bf16.msra.mxu0 0
    %819 = vmatprep.subr.bf16.mxu0 0
    %820 = vmatpush1.bf16.msra.mxu0 0
    %821 = vmatprep.subr.bf16.mxu0 0
    %822 = vmatpush1.bf16.msra.mxu0 0
    %823 = vmatprep.subr.bf16.mxu0 0
    %824 = vmatpush1.bf16.msra.mxu0 0
    %825 = vmatprep.subr.bf16.mxu0 0
    %826 = vmatpush1.bf16.msra.mxu0 0
    %827 = vmatprep.subr.bf16.mxu0 0
    %828 = vmatpush1.bf16.msra.mxu0 0
    %829 = vmatprep.subr.bf16.mxu0 0
    %830 = vmatpush1.bf16.msra.mxu0 0
    %831 = vmatprep.mubr.bf16.mxu0 0
    %832 = vmatmul.mubr.bf16.gmra.mrb[0].mxu0 %v682
    %v833 = vpop.f32.mrb[0].mxu0
    %v834 = vadd.f32 0.0, %v833
    %v835 = vpop.f32.mrb[0].mxu0
    %v836 = vadd.f32 0.0, %v835
    %v837 = vpop.f32.mrb[0].mxu0
    %v838 = vpop.f32.mrb[0].mxu0
    %839 = vdwg.mxu0
    %v844 = vcombine.low %v793, %v795
    %v845 = vcombine.low %v834, %v836
    %v847 = vunpack.c.l.s4 1966171168
    %v848 = vunpack.c.0.s8 %v847
    %v849 = vlaneseq
    %v850 = vshrl.u32 %v849, 7
    %v851 = vsub.s32 %v848, %v850
    %v852 = vrot.slane %v844, %v851
    %v854 = vunpack.c.l.s4 1966171168
    %v855 = vunpack.c.0.s8 %v854
    %v856 = vlaneseq
    %v857 = vshrl.u32 %v856, 7
    %v858 = vsub.s32 %v855, %v857
    %v859 = vrot.slane %v845, %v858
    %v860 = vcombine.low %v852, %v859
    %v862 = vunpack.c.l.s4 1966171168
    %v863 = vunpack.c.0.s8 %v862
    %v864 = vlaneseq
    %v865 = vshrl.u32 %v864, 7
    %v866 = vsub.s32 %v863, %v865
    %v867 = vrot.slane %v860, %v866
    %v869 = vadd.f32 %v757, %v867
    %v870 = vxor.u32 %v869, 2147483648
    %v871 = vmul.f32 %v870, 1.442695
    %v872 = vpow.pop %v871
    %v873 = vadd.f32 %v872, 1.0
    %v874 = vrcp.pop %v873
    %v875 = vmul.f32 1.0, %v874
    %v877 = vrot.slane %v869, 3
    %v879 = vtanh.pop %v877
    %v881 = vrot.slane %v875, 1
    %v883 = vmul.f32 %v881, %v677
    %v884 = vmul.f32 %v875, %v879
    %v885 = vadd.f32 %v883, %v884
    %v886 = vtanh.pop %v885
    %v887 = vrot.slane %v875, 2
    %v889 = vmul.f32 %v887, %v886
    %v890 = vpack.c.bf16 %v889, %v889
    %v891 = vpack.c.bf16 %v753, %v753
    %893 = vrot.lane.b32.xlu0 %v891, 64
    %v894 = vpop.permute.xlu0 %893
    %v896 = vsel %vm478, %v894, 0
    %898 = vmatprep.subr.bf16.mxu0 0
    %899 = vmatpush1.bf16.msra.mxu0 %v458
    %900 = vmatprep.subr.bf16.mxu0 0
    %901 = vmatpush1.bf16.msra.mxu0 %v459
    %902 = vmatprep.subr.bf16.mxu0 0
    %903 = vmatpush1.bf16.msra.mxu0 %v460
    %904 = vmatprep.subr.bf16.mxu0 0
    %905 = vmatpush1.bf16.msra.mxu0 %v461
    %906 = vmatprep.subr.bf16.mxu0 0
    %907 = vmatpush1.bf16.msra.mxu0 %v462
    %908 = vmatprep.subr.bf16.mxu0 0
    %909 = vmatpush1.bf16.msra.mxu0 %v463
    %910 = vmatprep.subr.bf16.mxu0 0
    %911 = vmatpush1.bf16.msra.mxu0 %v464
    %912 = vmatprep.subr.bf16.mxu0 0
    %913 = vmatpush1.bf16.msra.mxu0 %v465
    %914 = vmatprep.subr.bf16.mxu0 0
    %915 = vmatpush1.bf16.msra.mxu0 %v466
    %916 = vmatprep.subr.bf16.mxu0 0
    %917 = vmatpush1.bf16.msra.mxu0 %v467
    %918 = vmatprep.subr.bf16.mxu0 0
    %919 = vmatpush1.bf16.msra.mxu0 0
    %920 = vmatprep.subr.bf16.mxu0 0
    %921 = vmatpush1.bf16.msra.mxu0 0
    %922 = vmatprep.subr.bf16.mxu0 0
    %923 = vmatpush1.bf16.msra.mxu0 0
    %924 = vmatprep.subr.bf16.mxu0 0
    %925 = vmatpush1.bf16.msra.mxu0 0
    %926 = vmatprep.subr.bf16.mxu0 0
    %927 = vmatpush1.bf16.msra.mxu0 0
    %928 = vmatprep.subr.bf16.mxu0 0
    %929 = vmatpush1.bf16.msra.mxu0 0
    %930 = vmatprep.mubr.bf16.mxu0 %v896
    %931 = vmatmul.mubr.bf16.gmra.mrb[0].mxu0 %v890
    %v932 = vpop.f32.mrb[0].mxu0
    %v933 = vadd.f32 %v100, %v932
    %v934 = vpop.f32.mrb[0].mxu0
    %v935 = vpop.f32.mrb[0].mxu0
    %v936 = vpop.f32.mrb[0].mxu0
    %937 = vdwg.mxu0
    %v938 = vxor.u32 %v933, 2147483648
    %v939 = vmul.f32 %v938, 1.442695
    %v940 = vpow.pop %v939
    %v941 = vadd.f32 %v940, 1.0
    %v942 = vrcp.pop %v941
    %v943 = vmul.f32 1.0, %v942
    %v944 = vtanh.pop %v933
    %v945 = vmul.f32 %v943, %v747
    %947 = vrot.lane.b32.xlu0 %v944, 32
    %v948 = vpop.permute.xlu0 %947
    %v950 = vmul.f32 %v943, %v948
    %952 = vrot.lane.b32.xlu0 %v950, 32
    %v953 = vpop.permute.xlu0 %952
    %v955 = vadd.f32 %v945, %v953
    %v956 = vtanh.pop %v955
    %958 = vrot.lane.b32.xlu0 %v956, 32
    %v959 = vpop.permute.xlu0 %958
    %v961 = vmul.f32 %v943, %v959
    %s962 = sld [smem:[#allocation2 + $0x3]]
    %v963 = vstv %s962
    %v964 = vmul.f32 %v963, %v66
    %v965 = vadd.f32 %v964, %v67
    %966 = vmatprep.subr.bf16.mxu0 %v222
    %967 = vmatpush1.bf16.msra.mxu0 %v221
    %968 = vmatprep.subr.bf16.mxu0 %v226
    %969 = vmatpush1.bf16.msra.mxu0 %v225
    %970 = vmatprep.subr.bf16.mxu0 %v230
    %971 = vmatpush1.bf16.msra.mxu0 %v229
    %972 = vmatprep.subr.bf16.mxu0 %v234
    %973 = vmatpush1.bf16.msra.mxu0 %v233
    %974 = vmatprep.subr.bf16.mxu0 %v238
    %975 = vmatpush1.bf16.msra.mxu0 %v237
    %976 = vmatprep.subr.bf16.mxu0 %v242
    %977 = vmatpush1.bf16.msra.mxu0 %v241
    %978 = vmatprep.subr.bf16.mxu0 %v246
    %979 = vmatpush1.bf16.msra.mxu0 %v245
    %980 = vmatprep.subr.bf16.mxu0 %v250
    %981 = vmatpush1.bf16.msra.mxu0 %v249
    %982 = vmatprep.subr.bf16.mxu0 0
    %983 = vmatpush1.bf16.msra.mxu0 0
    %984 = vmatprep.subr.bf16.mxu0 0
    %985 = vmatpush1.bf16.msra.mxu0 0
    %986 = vmatprep.subr.bf16.mxu0 0
    %987 = vmatpush1.bf16.msra.mxu0 0
    %988 = vmatprep.subr.bf16.mxu0 0
    %989 = vmatpush1.bf16.msra.mxu0 0
    %990 = vmatprep.subr.bf16.mxu0 0
    %991 = vmatpush1.bf16.msra.mxu0 0
    %992 = vmatprep.subr.bf16.mxu0 0
    %993 = vmatpush1.bf16.msra.mxu0 0
    %994 = vmatprep.subr.bf16.mxu0 0
    %995 = vmatpush1.bf16.msra.mxu0 0
    %996 = vmatprep.subr.bf16.mxu0 0
    %997 = vmatpush1.bf16.msra.mxu0 0
    %998 = vmatprep.mubr.bf16.mxu0 0
    %999 = vmatmul.mubr.bf16.gmra.mrb[0].mxu0 %v890
    %v1000 = vpop.f32.mrb[0].mxu0
    %v1001 = vadd.f32 0.0, %v1000
    %v1002 = vpop.f32.mrb[0].mxu0
    %v1003 = vadd.f32 0.0, %v1002
    %v1004 = vpop.f32.mrb[0].mxu0
    %v1005 = vpop.f32.mrb[0].mxu0
    %1006 = vdwg.mxu0
    %1007 = vmatprep.subr.bf16.mxu0 %v224
    %1008 = vmatpush1.bf16.msra.mxu0 %v223
    %1009 = vmatprep.subr.bf16.mxu0 %v228
    %1010 = vmatpush1.bf16.msra.mxu0 %v227
    %1011 = vmatprep.subr.bf16.mxu0 %v232
    %1012 = vmatpush1.bf16.msra.mxu0 %v231
    %1013 = vmatprep.subr.bf16.mxu0 %v236
    %1014 = vmatpush1.bf16.msra.mxu0 %v235
    %1015 = vmatprep.subr.bf16.mxu0 %v240
    %1016 = vmatpush1.bf16.msra.mxu0 %v239
    %1017 = vmatprep.subr.bf16.mxu0 %v244
    %1018 = vmatpush1.bf16.msra.mxu0 %v243
    %1019 = vmatprep.subr.bf16.mxu0 %v248
    %1020 = vmatpush1.bf16.msra.mxu0 %v247
    %1021 = vmatprep.subr.bf16.mxu0 %v252
    %1022 = vmatpush1.bf16.msra.mxu0 %v251
    %1023 = vmatprep.subr.bf16.mxu0 0
    %1024 = vmatpush1.bf16.msra.mxu0 0
    %1025 = vmatprep.subr.bf16.mxu0 0
    %1026 = vmatpush1.bf16.msra.mxu0 0
    %1027 = vmatprep.subr.bf16.mxu0 0
    %1028 = vmatpush1.bf16.msra.mxu0 0
    %1029 = vmatprep.subr.bf16.mxu0 0
    %1030 = vmatpush1.bf16.msra.mxu0 0
    %1031 = vmatprep.subr.bf16.mxu0 0
    %1032 = vmatpush1.bf16.msra.mxu0 0
    %1033 = vmatprep.subr.bf16.mxu0 0
    %1034 = vmatpush1.bf16.msra.mxu0 0
    %1035 = vmatprep.subr.bf16.mxu0 0
    %1036 = vmatpush1.bf16.msra.mxu0 0
    %1037 = vmatprep.subr.bf16.mxu0 0
    %1038 = vmatpush1.bf16.msra.mxu0 0
    %1039 = vmatprep.mubr.bf16.mxu0 0
    %1040 = vmatmul.mubr.bf16.gmra.mrb[0].mxu0 %v890
    %v1041 = vpop.f32.mrb[0].mxu0
    %v1042 = vadd.f32 0.0, %v1041
    %v1043 = vpop.f32.mrb[0].mxu0
    %v1044 = vadd.f32 0.0, %v1043
    %v1045 = vpop.f32.mrb[0].mxu0
    %v1046 = vpop.f32.mrb[0].mxu0
    %1047 = vdwg.mxu0
    %v1052 = vcombine.low %v1001, %v1003
    %v1053 = vcombine.low %v1042, %v1044
    %v1055 = vunpack.c.l.s4 1966171168
    %v1056 = vunpack.c.0.s8 %v1055
    %v1057 = vlaneseq
    %v1058 = vshrl.u32 %v1057, 7
    %v1059 = vsub.s32 %v1056, %v1058
    %v1060 = vrot.slane %v1052, %v1059
    %v1062 = vunpack.c.l.s4 1966171168
    %v1063 = vunpack.c.0.s8 %v1062
    %v1064 = vlaneseq
    %v1065 = vshrl.u32 %v1064, 7
    %v1066 = vsub.s32 %v1063, %v1065
    %v1067 = vrot.slane %v1053, %v1066
    %v1068 = vcombine.low %v1060, %v1067
    %v1070 = vunpack.c.l.s4 1966171168
    %v1071 = vunpack.c.0.s8 %v1070
    %v1072 = vlaneseq
    %v1073 = vshrl.u32 %v1072, 7
    %v1074 = vsub.s32 %v1071, %v1073
    %v1075 = vrot.slane %v1068, %v1074
    %v1077 = vadd.f32 %v965, %v1075
    %v1078 = vxor.u32 %v1077, 2147483648
    %v1079 = vmul.f32 %v1078, 1.442695
    %v1080 = vpow.pop %v1079
    %v1081 = vadd.f32 %v1080, 1.0
    %v1082 = vrcp.pop %v1081
    %v1083 = vmul.f32 1.0, %v1082
    %v1085 = vrot.slane %v1077, 3
    %v1087 = vtanh.pop %v1085
    %v1089 = vrot.slane %v1083, 1
    %v1091 = vmul.f32 %v1089, %v885
    %v1092 = vmul.f32 %v1083, %v1087
    %v1093 = vadd.f32 %v1091, %v1092
    %v1094 = vtanh.pop %v1093
    %v1095 = vrot.slane %v1083, 2
    %v1097 = vmul.f32 %v1095, %v1094
    %v1098 = vpack.c.bf16 %v1097, %v1097
    %v1099 = vpack.c.bf16 %v961, %v961
    %1101 = vrot.lane.b32.xlu0 %v1099, 64
    %v1102 = vpop.permute.xlu0 %1101
    %v1104 = vsel %vm478, %v1102, 0
    %1106 = vmatprep.subr.bf16.mxu0 0
    %1107 = vmatpush1.bf16.msra.mxu0 %v458
    %1108 = vmatprep.subr.bf16.mxu0 0
    %1109 = vmatpush1.bf16.msra.mxu0 %v459
    %1110 = vmatprep.subr.bf16.mxu0 0
    %1111 = vmatpush1.bf16.msra.mxu0 %v460
    %1112 = vmatprep.subr.bf16.mxu0 0
    %1113 = vmatpush1.bf16.msra.mxu0 %v461
    %1114 = vmatprep.subr.bf16.mxu0 0
    %1115 = vmatpush1.bf16.msra.mxu0 %v462
    %1116 = vmatprep.subr.bf16.mxu0 0
    %1117 = vmatpush1.bf16.msra.mxu0 %v463
    %1118 = vmatprep.subr.bf16.mxu0 0
    %1119 = vmatpush1.bf16.msra.mxu0 %v464
    %1120 = vmatprep.subr.bf16.mxu0 0
    %1121 = vmatpush1.bf16.msra.mxu0 %v465
    %1122 = vmatprep.subr.bf16.mxu0 0
    %1123 = vmatpush1.bf16.msra.mxu0 %v466
    %1124 = vmatprep.subr.bf16.mxu0 0
    %1125 = vmatpush1.bf16.msra.mxu0 %v467
    %1126 = vmatprep.subr.bf16.mxu0 0
    %1127 = vmatpush1.bf16.msra.mxu0 0
    %1128 = vmatprep.subr.bf16.mxu0 0
    %1129 = vmatpush1.bf16.msra.mxu0 0
    %1130 = vmatprep.subr.bf16.mxu0 0
    %1131 = vmatpush1.bf16.msra.mxu0 0
    %1132 = vmatprep.subr.bf16.mxu0 0
    %1133 = vmatpush1.bf16.msra.mxu0 0
    %1134 = vmatprep.subr.bf16.mxu0 0
    %1135 = vmatpush1.bf16.msra.mxu0 0
    %1136 = vmatprep.subr.bf16.mxu0 0
    %1137 = vmatpush1.bf16.msra.mxu0 0
    %1138 = vmatprep.mubr.bf16.mxu0 %v1104
    %1139 = vmatmul.mubr.bf16.gmra.mrb[0].mxu0 %v1098
    %v1140 = vpop.f32.mrb[0].mxu0
    %v1141 = vadd.f32 %v100, %v1140
    %v1142 = vpop.f32.mrb[0].mxu0
    %v1143 = vpop.f32.mrb[0].mxu0
    %v1144 = vpop.f32.mrb[0].mxu0
    %1145 = vdwg.mxu0
    %v1146 = vxor.u32 %v1141, 2147483648
    %v1147 = vmul.f32 %v1146, 1.442695
    %v1148 = vpow.pop %v1147
    %v1149 = vadd.f32 %v1148, 1.0
    %v1150 = vrcp.pop %v1149
    %v1151 = vmul.f32 1.0, %v1150
    %v1152 = vtanh.pop %v1141
    %v1153 = vmul.f32 %v1151, %v955
    %1155 = vrot.lane.b32.xlu0 %v1152, 32
    %v1156 = vpop.permute.xlu0 %1155
    %v1158 = vmul.f32 %v1151, %v1156
    %1160 = vrot.lane.b32.xlu0 %v1158, 32
    %v1161 = vpop.permute.xlu0 %1160
    %v1163 = vadd.f32 %v1153, %v1161
    %v1164 = vtanh.pop %v1163
    %1166 = vrot.lane.b32.xlu0 %v1164, 32
    %v1167 = vpop.permute.xlu0 %1166
    %v1169 = vmul.f32 %v1151, %v1167
    %s1170 = sld [smem:[#allocation2 + $0x4]]
    %v1171 = vstv %s1170
    %v1172 = vmul.f32 %v1171, %v66
    %v1173 = vadd.f32 %v1172, %v67
    %1174 = vmatprep.subr.bf16.mxu0 %v222
    %1175 = vmatpush1.bf16.msra.mxu0 %v221
    %1176 = vmatprep.subr.bf16.mxu0 %v226
    %1177 = vmatpush1.bf16.msra.mxu0 %v225
    %1178 = vmatprep.subr.bf16.mxu0 %v230
    %1179 = vmatpush1.bf16.msra.mxu0 %v229
    %1180 = vmatprep.subr.bf16.mxu0 %v234
    %1181 = vmatpush1.bf16.msra.mxu0 %v233
    %1182 = vmatprep.subr.bf16.mxu0 %v238
    %1183 = vmatpush1.bf16.msra.mxu0 %v237
    %1184 = vmatprep.subr.bf16.mxu0 %v242
    %1185 = vmatpush1.bf16.msra.mxu0 %v241
    %1186 = vmatprep.subr.bf16.mxu0 %v246
    %1187 = vmatpush1.bf16.msra.mxu0 %v245
    %1188 = vmatprep.subr.bf16.mxu0 %v250
    %1189 = vmatpush1.bf16.msra.mxu0 %v249
    %1190 = vmatprep.subr.bf16.mxu0 0
    %1191 = vmatpush1.bf16.msra.mxu0 0
    %1192 = vmatprep.subr.bf16.mxu0 0
    %1193 = vmatpush1.bf16.msra.mxu0 0
    %1194 = vmatprep.subr.bf16.mxu0 0
    %1195 = vmatpush1.bf16.msra.mxu0 0
    %1196 = vmatprep.subr.bf16.mxu0 0
    %1197 = vmatpush1.bf16.msra.mxu0 0
    %1198 = vmatprep.subr.bf16.mxu0 0
    %1199 = vmatpush1.bf16.msra.mxu0 0
    %1200 = vmatprep.subr.bf16.mxu0 0
    %1201 = vmatpush1.bf16.msra.mxu0 0
    %1202 = vmatprep.subr.bf16.mxu0 0
    %1203 = vmatpush1.bf16.msra.mxu0 0
    %1204 = vmatprep.subr.bf16.mxu0 0
    %1205 = vmatpush1.bf16.msra.mxu0 0
    %1206 = vmatprep.mubr.bf16.mxu0 0
    %1207 = vmatmul.mubr.bf16.gmra.mrb[0].mxu0 %v1098
    %v1208 = vpop.f32.mrb[0].mxu0
    %v1209 = vadd.f32 0.0, %v1208
    %v1210 = vpop.f32.mrb[0].mxu0
    %v1211 = vadd.f32 0.0, %v1210
    %v1212 = vpop.f32.mrb[0].mxu0
    %v1213 = vpop.f32.mrb[0].mxu0
    %1214 = vdwg.mxu0
    %1215 = vmatprep.subr.bf16.mxu0 %v224
    %1216 = vmatpush1.bf16.msra.mxu0 %v223
    %1217 = vmatprep.subr.bf16.mxu0 %v228
    %1218 = vmatpush1.bf16.msra.mxu0 %v227
    %1219 = vmatprep.subr.bf16.mxu0 %v232
    %1220 = vmatpush1.bf16.msra.mxu0 %v231
    %1221 = vmatprep.subr.bf16.mxu0 %v236
    %1222 = vmatpush1.bf16.msra.mxu0 %v235
    %1223 = vmatprep.subr.bf16.mxu0 %v240
    %1224 = vmatpush1.bf16.msra.mxu0 %v239
    %1225 = vmatprep.subr.bf16.mxu0 %v244
    %1226 = vmatpush1.bf16.msra.mxu0 %v243
    %1227 = vmatprep.subr.bf16.mxu0 %v248
    %1228 = vmatpush1.bf16.msra.mxu0 %v247
    %1229 = vmatprep.subr.bf16.mxu0 %v252
    %1230 = vmatpush1.bf16.msra.mxu0 %v251
    %1231 = vmatprep.subr.bf16.mxu0 0
    %1232 = vmatpush1.bf16.msra.mxu0 0
    %1233 = vmatprep.subr.bf16.mxu0 0
    %1234 = vmatpush1.bf16.msra.mxu0 0
    %1235 = vmatprep.subr.bf16.mxu0 0
    %1236 = vmatpush1.bf16.msra.mxu0 0
    %1237 = vmatprep.subr.bf16.mxu0 0
    %1238 = vmatpush1.bf16.msra.mxu0 0
    %1239 = vmatprep.subr.bf16.mxu0 0
    %1240 = vmatpush1.bf16.msra.mxu0 0
    %1241 = vmatprep.subr.bf16.mxu0 0
    %1242 = vmatpush1.bf16.msra.mxu0 0
    %1243 = vmatprep.subr.bf16.mxu0 0
    %1244 = vmatpush1.bf16.msra.mxu0 0
    %1245 = vmatprep.subr.bf16.mxu0 0
    %1246 = vmatpush1.bf16.msra.mxu0 0
    %1247 = vmatprep.mubr.bf16.mxu0 0
    %1248 = vmatmul.mubr.bf16.gmra.mrb[0].mxu0 %v1098
    %v1249 = vpop.f32.mrb[0].mxu0
    %v1250 = vadd.f32 0.0, %v1249
    %v1251 = vpop.f32.mrb[0].mxu0
    %v1252 = vadd.f32 0.0, %v1251
    %v1253 = vpop.f32.mrb[0].mxu0
    %v1254 = vpop.f32.mrb[0].mxu0
    %1255 = vdwg.mxu0
    %v1260 = vcombine.low %v1209, %v1211
    %v1261 = vcombine.low %v1250, %v1252
    %v1263 = vunpack.c.l.s4 1966171168
    %v1264 = vunpack.c.0.s8 %v1263
    %v1265 = vlaneseq
    %v1266 = vshrl.u32 %v1265, 7
    %v1267 = vsub.s32 %v1264, %v1266
    %v1268 = vrot.slane %v1260, %v1267
    %v1270 = vunpack.c.l.s4 1966171168
    %v1271 = vunpack.c.0.s8 %v1270
    %v1272 = vlaneseq
    %v1273 = vshrl.u32 %v1272, 7
    %v1274 = vsub.s32 %v1271, %v1273
    %v1275 = vrot.slane %v1261, %v1274
    %v1276 = vcombine.low %v1268, %v1275
    %v1278 = vunpack.c.l.s4 1966171168
    %v1279 = vunpack.c.0.s8 %v1278
    %v1280 = vlaneseq
    %v1281 = vshrl.u32 %v1280, 7
    %v1282 = vsub.s32 %v1279, %v1281
    %v1283 = vrot.slane %v1276, %v1282
    %v1285 = vadd.f32 %v1173, %v1283
    %v1286 = vxor.u32 %v1285, 2147483648
    %v1287 = vmul.f32 %v1286, 1.442695
    %v1288 = vpow.pop %v1287
    %v1289 = vadd.f32 %v1288, 1.0
    %v1290 = vrcp.pop %v1289
    %v1291 = vmul.f32 1.0, %v1290
    %v1293 = vrot.slane %v1285, 3
    %v1295 = vtanh.pop %v1293
    %v1297 = vrot.slane %v1291, 1
    %v1299 = vmul.f32 %v1297, %v1093
    %v1300 = vmul.f32 %v1291, %v1295
    %v1301 = vadd.f32 %v1299, %v1300
    %v1302 = vtanh.pop %v1301
    %v1303 = vrot.slane %v1291, 2
    %v1305 = vmul.f32 %v1303, %v1302
    %v1306 = vpack.c.bf16 %v1305, %v1305
    %v1307 = vpack.c.bf16 %v1169, %v1169
    %1309 = vrot.lane.b32.xlu0 %v1307, 64
    %v1310 = vpop.permute.xlu0 %1309
    %v1312 = vsel %vm478, %v1310, 0
    %1314 = vmatprep.subr.bf16.mxu0 0
    %1315 = vmatpush1.bf16.msra.mxu0 %v458
    %1316 = vmatprep.subr.bf16.mxu0 0
    %1317 = vmatpush1.bf16.msra.mxu0 %v459
    %1318 = vmatprep.subr.bf16.mxu0 0
    %1319 = vmatpush1.bf16.msra.mxu0 %v460
    %1320 = vmatprep.subr.bf16.mxu0 0
    %1321 = vmatpush1.bf16.msra.mxu0 %v461
    %1322 = vmatprep.subr.bf16.mxu0 0
    %1323 = vmatpush1.bf16.msra.mxu0 %v462
    %1324 = vmatprep.subr.bf16.mxu0 0
    %1325 = vmatpush1.bf16.msra.mxu0 %v463
    %1326 = vmatprep.subr.bf16.mxu0 0
    %1327 = vmatpush1.bf16.msra.mxu0 %v464
    %1328 = vmatprep.subr.bf16.mxu0 0
    %1329 = vmatpush1.bf16.msra.mxu0 %v465
    %1330 = vmatprep.subr.bf16.mxu0 0
    %1331 = vmatpush1.bf16.msra.mxu0 %v466
    %1332 = vmatprep.subr.bf16.mxu0 0
    %1333 = vmatpush1.bf16.msra.mxu0 %v467
    %1334 = vmatprep.subr.bf16.mxu0 0
    %1335 = vmatpush1.bf16.msra.mxu0 0
    %1336 = vmatprep.subr.bf16.mxu0 0
    %1337 = vmatpush1.bf16.msra.mxu0 0
    %1338 = vmatprep.subr.bf16.mxu0 0
    %1339 = vmatpush1.bf16.msra.mxu0 0
    %1340 = vmatprep.subr.bf16.mxu0 0
    %1341 = vmatpush1.bf16.msra.mxu0 0
    %1342 = vmatprep.subr.bf16.mxu0 0
    %1343 = vmatpush1.bf16.msra.mxu0 0
    %1344 = vmatprep.subr.bf16.mxu0 0
    %1345 = vmatpush1.bf16.msra.mxu0 0
    %1346 = vmatprep.mubr.bf16.mxu0 %v1312
    %1347 = vmatmul.mubr.bf16.gmra.mrb[0].mxu0 %v1306
    %v1348 = vpop.f32.mrb[0].mxu0
    %v1349 = vadd.f32 %v100, %v1348
    %v1350 = vpop.f32.mrb[0].mxu0
    %v1351 = vpop.f32.mrb[0].mxu0
    %v1352 = vpop.f32.mrb[0].mxu0
    %1353 = vdwg.mxu0
    %v1354 = vxor.u32 %v1349, 2147483648
    %v1355 = vmul.f32 %v1354, 1.442695
    %v1356 = vpow.pop %v1355
    %v1357 = vadd.f32 %v1356, 1.0
    %v1358 = vrcp.pop %v1357
    %v1359 = vmul.f32 1.0, %v1358
    %v1360 = vtanh.pop %v1349
    %v1361 = vmul.f32 %v1359, %v1163
    %1363 = vrot.lane.b32.xlu0 %v1360, 32
    %v1364 = vpop.permute.xlu0 %1363
    %v1366 = vmul.f32 %v1359, %v1364
    %1368 = vrot.lane.b32.xlu0 %v1366, 32
    %v1369 = vpop.permute.xlu0 %1368
    %v1371 = vadd.f32 %v1361, %v1369
    %v1372 = vtanh.pop %v1371
    %1374 = vrot.lane.b32.xlu0 %v1372, 32
    %v1375 = vpop.permute.xlu0 %1374
    %v1377 = vmul.f32 %v1359, %v1375
    %s1378 = sld [smem:[#allocation2 + $0x5]]
    %v1379 = vstv %s1378
    %v1380 = vmul.f32 %v1379, %v66
    %v1381 = vadd.f32 %v1380, %v67
    %1382 = vmatprep.subr.bf16.mxu0 %v222
    %1383 = vmatpush1.bf16.msra.mxu0 %v221
    %1384 = vmatprep.subr.bf16.mxu0 %v226
    %1385 = vmatpush1.bf16.msra.mxu0 %v225
    %1386 = vmatprep.subr.bf16.mxu0 %v230
    %1387 = vmatpush1.bf16.msra.mxu0 %v229
    %1388 = vmatprep.subr.bf16.mxu0 %v234
    %1389 = vmatpush1.bf16.msra.mxu0 %v233
    %1390 = vmatprep.subr.bf16.mxu0 %v238
    %1391 = vmatpush1.bf16.msra.mxu0 %v237
    %1392 = vmatprep.subr.bf16.mxu0 %v242
    %1393 = vmatpush1.bf16.msra.mxu0 %v241
    %1394 = vmatprep.subr.bf16.mxu0 %v246
    %1395 = vmatpush1.bf16.msra.mxu0 %v245
    %1396 = vmatprep.subr.bf16.mxu0 %v250
    %1397 = vmatpush1.bf16.msra.mxu0 %v249
    %1398 = vmatprep.subr.bf16.mxu0 0
    %1399 = vmatpush1.bf16.msra.mxu0 0
    %1400 = vmatprep.subr.bf16.mxu0 0
    %1401 = vmatpush1.bf16.msra.mxu0 0
    %1402 = vmatprep.subr.bf16.mxu0 0
    %1403 = vmatpush1.bf16.msra.mxu0 0
    %1404 = vmatprep.subr.bf16.mxu0 0
    %1405 = vmatpush1.bf16.msra.mxu0 0
    %1406 = vmatprep.subr.bf16.mxu0 0
    %1407 = vmatpush1.bf16.msra.mxu0 0
    %1408 = vmatprep.subr.bf16.mxu0 0
    %1409 = vmatpush1.bf16.msra.mxu0 0
    %1410 = vmatprep.subr.bf16.mxu0 0
    %1411 = vmatpush1.bf16.msra.mxu0 0
    %1412 = vmatprep.subr.bf16.mxu0 0
    %1413 = vmatpush1.bf16.msra.mxu0 0
    %1414 = vmatprep.mubr.bf16.mxu0 0
    %1415 = vmatmul.mubr.bf16.gmra.mrb[0].mxu0 %v1306
    %v1416 = vpop.f32.mrb[0].mxu0
    %v1417 = vadd.f32 0.0, %v1416
    %v1418 = vpop.f32.mrb[0].mxu0
    %v1419 = vadd.f32 0.0, %v1418
    %v1420 = vpop.f32.mrb[0].mxu0
    %v1421 = vpop.f32.mrb[0].mxu0
    %1422 = vdwg.mxu0
    %1423 = vmatprep.subr.bf16.mxu0 %v224
    %1424 = vmatpush1.bf16.msra.mxu0 %v223
    %1425 = vmatprep.subr.bf16.mxu0 %v228
    %1426 = vmatpush1.bf16.msra.mxu0 %v227
    %1427 = vmatprep.subr.bf16.mxu0 %v232
    %1428 = vmatpush1.bf16.msra.mxu0 %v231
    %1429 = vmatprep.subr.bf16.mxu0 %v236
    %1430 = vmatpush1.bf16.msra.mxu0 %v235
    %1431 = vmatprep.subr.bf16.mxu0 %v240
    %1432 = vmatpush1.bf16.msra.mxu0 %v239
    %1433 = vmatprep.subr.bf16.mxu0 %v244
    %1434 = vmatpush1.bf16.msra.mxu0 %v243
    %1435 = vmatprep.subr.bf16.mxu0 %v248
    %1436 = vmatpush1.bf16.msra.mxu0 %v247
    %1437 = vmatprep.subr.bf16.mxu0 %v252
    %1438 = vmatpush1.bf16.msra.mxu0 %v251
    %1439 = vmatprep.subr.bf16.mxu0 0
    %1440 = vmatpush1.bf16.msra.mxu0 0
    %1441 = vmatprep.subr.bf16.mxu0 0
    %1442 = vmatpush1.bf16.msra.mxu0 0
    %1443 = vmatprep.subr.bf16.mxu0 0
    %1444 = vmatpush1.bf16.msra.mxu0 0
    %1445 = vmatprep.subr.bf16.mxu0 0
    %1446 = vmatpush1.bf16.msra.mxu0 0
    %1447 = vmatprep.subr.bf16.mxu0 0
    %1448 = vmatpush1.bf16.msra.mxu0 0
    %1449 = vmatprep.subr.bf16.mxu0 0
    %1450 = vmatpush1.bf16.msra.mxu0 0
    %1451 = vmatprep.subr.bf16.mxu0 0
    %1452 = vmatpush1.bf16.msra.mxu0 0
    %1453 = vmatprep.subr.bf16.mxu0 0
    %1454 = vmatpush1.bf16.msra.mxu0 0
    %1455 = vmatprep.mubr.bf16.mxu0 0
    %1456 = vmatmul.mubr.bf16.gmra.mrb[0].mxu0 %v1306
    %v1457 = vpop.f32.mrb[0].mxu0
    %v1458 = vadd.f32 0.0, %v1457
    %v1459 = vpop.f32.mrb[0].mxu0
    %v1460 = vadd.f32 0.0, %v1459
    %v1461 = vpop.f32.mrb[0].mxu0
    %v1462 = vpop.f32.mrb[0].mxu0
    %1463 = vdwg.mxu0
    %v1468 = vcombine.low %v1417, %v1419
    %v1469 = vcombine.low %v1458, %v1460
    %v1471 = vunpack.c.l.s4 1966171168
    %v1472 = vunpack.c.0.s8 %v1471
    %v1473 = vlaneseq
    %v1474 = vshrl.u32 %v1473, 7
    %v1475 = vsub.s32 %v1472, %v1474
    %v1476 = vrot.slane %v1468, %v1475
    %v1478 = vunpack.c.l.s4 1966171168
    %v1479 = vunpack.c.0.s8 %v1478
    %v1480 = vlaneseq
    %v1481 = vshrl.u32 %v1480, 7
    %v1482 = vsub.s32 %v1479, %v1481
    %v1483 = vrot.slane %v1469, %v1482
    %v1484 = vcombine.low %v1476, %v1483
    %v1486 = vunpack.c.l.s4 1966171168
    %v1487 = vunpack.c.0.s8 %v1486
    %v1488 = vlaneseq
    %v1489 = vshrl.u32 %v1488, 7
    %v1490 = vsub.s32 %v1487, %v1489
    %v1491 = vrot.slane %v1484, %v1490
    %v1493 = vadd.f32 %v1381, %v1491
    %v1494 = vxor.u32 %v1493, 2147483648
    %v1495 = vmul.f32 %v1494, 1.442695
    %v1496 = vpow.pop %v1495
    %v1497 = vadd.f32 %v1496, 1.0
    %v1498 = vrcp.pop %v1497
    %v1499 = vmul.f32 1.0, %v1498
    %v1501 = vrot.slane %v1493, 3
    %v1503 = vtanh.pop %v1501
    %v1505 = vrot.slane %v1499, 1
    %v1507 = vmul.f32 %v1505, %v1301
    %v1508 = vmul.f32 %v1499, %v1503
    %v1509 = vadd.f32 %v1507, %v1508
    %v1510 = vtanh.pop %v1509
    %v1511 = vrot.slane %v1499, 2
    %v1513 = vmul.f32 %v1511, %v1510
    %v1514 = vpack.c.bf16 %v1513, %v1513
    %v1515 = vpack.c.bf16 %v1377, %v1377
    %1517 = vrot.lane.b32.xlu0 %v1515, 64
    %v1518 = vpop.permute.xlu0 %1517
    %v1520 = vsel %vm478, %v1518, 0
    %1522 = vmatprep.subr.bf16.mxu0 0
    %1523 = vmatpush1.bf16.msra.mxu0 %v458
    %1524 = vmatprep.subr.bf16.mxu0 0
    %1525 = vmatpush1.bf16.msra.mxu0 %v459
    %1526 = vmatprep.subr.bf16.mxu0 0
    %1527 = vmatpush1.bf16.msra.mxu0 %v460
    %1528 = vmatprep.subr.bf16.mxu0 0
    %1529 = vmatpush1.bf16.msra.mxu0 %v461
    %1530 = vmatprep.subr.bf16.mxu0 0
    %1531 = vmatpush1.bf16.msra.mxu0 %v462
    %1532 = vmatprep.subr.bf16.mxu0 0
    %1533 = vmatpush1.bf16.msra.mxu0 %v463
    %1534 = vmatprep.subr.bf16.mxu0 0
    %1535 = vmatpush1.bf16.msra.mxu0 %v464
    %1536 = vmatprep.subr.bf16.mxu0 0
    %1537 = vmatpush1.bf16.msra.mxu0 %v465
    %1538 = vmatprep.subr.bf16.mxu0 0
    %1539 = vmatpush1.bf16.msra.mxu0 %v466
    %1540 = vmatprep.subr.bf16.mxu0 0
    %1541 = vmatpush1.bf16.msra.mxu0 %v467
    %1542 = vmatprep.subr.bf16.mxu0 0
    %1543 = vmatpush1.bf16.msra.mxu0 0
    %1544 = vmatprep.subr.bf16.mxu0 0
    %1545 = vmatpush1.bf16.msra.mxu0 0
    %1546 = vmatprep.subr.bf16.mxu0 0
    %1547 = vmatpush1.bf16.msra.mxu0 0
    %1548 = vmatprep.subr.bf16.mxu0 0
    %1549 = vmatpush1.bf16.msra.mxu0 0
    %1550 = vmatprep.subr.bf16.mxu0 0
    %1551 = vmatpush1.bf16.msra.mxu0 0
    %1552 = vmatprep.subr.bf16.mxu0 0
    %1553 = vmatpush1.bf16.msra.mxu0 0
    %1554 = vmatprep.mubr.bf16.mxu0 %v1520
    %1555 = vmatmul.mubr.bf16.gmra.mrb[0].mxu0 %v1514
    %v1556 = vpop.f32.mrb[0].mxu0
    %v1557 = vadd.f32 %v100, %v1556
    %v1558 = vpop.f32.mrb[0].mxu0
    %v1559 = vpop.f32.mrb[0].mxu0
    %v1560 = vpop.f32.mrb[0].mxu0
    %1561 = vdwg.mxu0
    %v1562 = vxor.u32 %v1557, 2147483648
    %v1563 = vmul.f32 %v1562, 1.442695
    %v1564 = vpow.pop %v1563
    %v1565 = vadd.f32 %v1564, 1.0
    %v1566 = vrcp.pop %v1565
    %v1567 = vmul.f32 1.0, %v1566
    %v1568 = vtanh.pop %v1557
    %v1569 = vmul.f32 %v1567, %v1371
    %1571 = vrot.lane.b32.xlu0 %v1568, 32
    %v1572 = vpop.permute.xlu0 %1571
    %v1574 = vmul.f32 %v1567, %v1572
    %1576 = vrot.lane.b32.xlu0 %v1574, 32
    %v1577 = vpop.permute.xlu0 %1576
    %v1579 = vadd.f32 %v1569, %v1577
    %v1580 = vtanh.pop %v1579
    %1582 = vrot.lane.b32.xlu0 %v1580, 32
    %v1583 = vpop.permute.xlu0 %1582
    %v1585 = vmul.f32 %v1567, %v1583
    %s1586 = sld [smem:[#allocation2 + $0x6]]
    %v1587 = vstv %s1586
    %v1588 = vmul.f32 %v1587, %v66
    %v1589 = vadd.f32 %v1588, %v67
    %1590 = vmatprep.subr.bf16.mxu0 %v222
    %1591 = vmatpush1.bf16.msra.mxu0 %v221
    %1592 = vmatprep.subr.bf16.mxu0 %v226
    %1593 = vmatpush1.bf16.msra.mxu0 %v225
    %1594 = vmatprep.subr.bf16.mxu0 %v230
    %1595 = vmatpush1.bf16.msra.mxu0 %v229
    %1596 = vmatprep.subr.bf16.mxu0 %v234
    %1597 = vmatpush1.bf16.msra.mxu0 %v233
    %1598 = vmatprep.subr.bf16.mxu0 %v238
    %1599 = vmatpush1.bf16.msra.mxu0 %v237
    %1600 = vmatprep.subr.bf16.mxu0 %v242
    %1601 = vmatpush1.bf16.msra.mxu0 %v241
    %1602 = vmatprep.subr.bf16.mxu0 %v246
    %1603 = vmatpush1.bf16.msra.mxu0 %v245
    %1604 = vmatprep.subr.bf16.mxu0 %v250
    %1605 = vmatpush1.bf16.msra.mxu0 %v249
    %1606 = vmatprep.subr.bf16.mxu0 0
    %1607 = vmatpush1.bf16.msra.mxu0 0
    %1608 = vmatprep.subr.bf16.mxu0 0
    %1609 = vmatpush1.bf16.msra.mxu0 0
    %1610 = vmatprep.subr.bf16.mxu0 0
    %1611 = vmatpush1.bf16.msra.mxu0 0
    %1612 = vmatprep.subr.bf16.mxu0 0
    %1613 = vmatpush1.bf16.msra.mxu0 0
    %1614 = vmatprep.subr.bf16.mxu0 0
    %1615 = vmatpush1.bf16.msra.mxu0 0
    %1616 = vmatprep.subr.bf16.mxu0 0
    %1617 = vmatpush1.bf16.msra.mxu0 0
    %1618 = vmatprep.subr.bf16.mxu0 0
    %1619 = vmatpush1.bf16.msra.mxu0 0
    %1620 = vmatprep.subr.bf16.mxu0 0
    %1621 = vmatpush1.bf16.msra.mxu0 0
    %1622 = vmatprep.mubr.bf16.mxu0 0
    %1623 = vmatmul.mubr.bf16.gmra.mrb[0].mxu0 %v1514
    %v1624 = vpop.f32.mrb[0].mxu0
    %v1625 = vadd.f32 0.0, %v1624
    %v1626 = vpop.f32.mrb[0].mxu0
    %v1627 = vadd.f32 0.0, %v1626
    %v1628 = vpop.f32.mrb[0].mxu0
    %v1629 = vpop.f32.mrb[0].mxu0
    %1630 = vdwg.mxu0
    %1631 = vmatprep.subr.bf16.mxu0 %v224
    %1632 = vmatpush1.bf16.msra.mxu0 %v223
    %1633 = vmatprep.subr.bf16.mxu0 %v228
    %1634 = vmatpush1.bf16.msra.mxu0 %v227
    %1635 = vmatprep.subr.bf16.mxu0 %v232
    %1636 = vmatpush1.bf16.msra.mxu0 %v231
    %1637 = vmatprep.subr.bf16.mxu0 %v236
    %1638 = vmatpush1.bf16.msra.mxu0 %v235
    %1639 = vmatprep.subr.bf16.mxu0 %v240
    %1640 = vmatpush1.bf16.msra.mxu0 %v239
    %1641 = vmatprep.subr.bf16.mxu0 %v244
    %1642 = vmatpush1.bf16.msra.mxu0 %v243
    %1643 = vmatprep.subr.bf16.mxu0 %v248
    %1644 = vmatpush1.bf16.msra.mxu0 %v247
    %1645 = vmatprep.subr.bf16.mxu0 %v252
    %1646 = vmatpush1.bf16.msra.mxu0 %v251
    %1647 = vmatprep.subr.bf16.mxu0 0
    %1648 = vmatpush1.bf16.msra.mxu0 0
    %1649 = vmatprep.subr.bf16.mxu0 0
    %1650 = vmatpush1.bf16.msra.mxu0 0
    %1651 = vmatprep.subr.bf16.mxu0 0
    %1652 = vmatpush1.bf16.msra.mxu0 0
    %1653 = vmatprep.subr.bf16.mxu0 0
    %1654 = vmatpush1.bf16.msra.mxu0 0
    %1655 = vmatprep.subr.bf16.mxu0 0
    %1656 = vmatpush1.bf16.msra.mxu0 0
    %1657 = vmatprep.subr.bf16.mxu0 0
    %1658 = vmatpush1.bf16.msra.mxu0 0
    %1659 = vmatprep.subr.bf16.mxu0 0
    %1660 = vmatpush1.bf16.msra.mxu0 0
    %1661 = vmatprep.subr.bf16.mxu0 0
    %1662 = vmatpush1.bf16.msra.mxu0 0
    %1663 = vmatprep.mubr.bf16.mxu0 0
    %1664 = vmatmul.mubr.bf16.gmra.mrb[0].mxu0 %v1514
    %v1665 = vpop.f32.mrb[0].mxu0
    %v1666 = vadd.f32 0.0, %v1665
    %v1667 = vpop.f32.mrb[0].mxu0
    %v1668 = vadd.f32 0.0, %v1667
    %v1669 = vpop.f32.mrb[0].mxu0
    %v1670 = vpop.f32.mrb[0].mxu0
    %1671 = vdwg.mxu0
    %v1676 = vcombine.low %v1625, %v1627
    %v1677 = vcombine.low %v1666, %v1668
    %v1679 = vunpack.c.l.s4 1966171168
    %v1680 = vunpack.c.0.s8 %v1679
    %v1681 = vlaneseq
    %v1682 = vshrl.u32 %v1681, 7
    %v1683 = vsub.s32 %v1680, %v1682
    %v1684 = vrot.slane %v1676, %v1683
    %v1686 = vunpack.c.l.s4 1966171168
    %v1687 = vunpack.c.0.s8 %v1686
    %v1688 = vlaneseq
    %v1689 = vshrl.u32 %v1688, 7
    %v1690 = vsub.s32 %v1687, %v1689
    %v1691 = vrot.slane %v1677, %v1690
    %v1692 = vcombine.low %v1684, %v1691
    %v1694 = vunpack.c.l.s4 1966171168
    %v1695 = vunpack.c.0.s8 %v1694
    %v1696 = vlaneseq
    %v1697 = vshrl.u32 %v1696, 7
    %v1698 = vsub.s32 %v1695, %v1697
    %v1699 = vrot.slane %v1692, %v1698
    %v1701 = vadd.f32 %v1589, %v1699
    %v1702 = vxor.u32 %v1701, 2147483648
    %v1703 = vmul.f32 %v1702, 1.442695
    %v1704 = vpow.pop %v1703
    %v1705 = vadd.f32 %v1704, 1.0
    %v1706 = vrcp.pop %v1705
    %v1707 = vmul.f32 1.0, %v1706
    %v1709 = vrot.slane %v1701, 3
    %v1711 = vtanh.pop %v1709
    %v1713 = vrot.slane %v1707, 1
    %v1715 = vmul.f32 %v1713, %v1509
    %v1716 = vmul.f32 %v1707, %v1711
    %v1717 = vadd.f32 %v1715, %v1716
    %v1718 = vtanh.pop %v1717
    %v1719 = vrot.slane %v1707, 2
    %v1721 = vmul.f32 %v1719, %v1718
    %v1722 = vpack.c.bf16 %v1721, %v1721
    %v1723 = vpack.c.bf16 %v1585, %v1585
    %1725 = vrot.lane.b32.xlu0 %v1723, 64
    %v1726 = vpop.permute.xlu0 %1725
    %v1728 = vsel %vm478, %v1726, 0
    %1730 = vmatprep.subr.bf16.mxu0 0
    %1731 = vmatpush1.bf16.msra.mxu0 %v458
    %1732 = vmatprep.subr.bf16.mxu0 0
    %1733 = vmatpush1.bf16.msra.mxu0 %v459
    %1734 = vmatprep.subr.bf16.mxu0 0
    %1735 = vmatpush1.bf16.msra.mxu0 %v460
    %1736 = vmatprep.subr.bf16.mxu0 0
    %1737 = vmatpush1.bf16.msra.mxu0 %v461
    %1738 = vmatprep.subr.bf16.mxu0 0
    %1739 = vmatpush1.bf16.msra.mxu0 %v462
    %1740 = vmatprep.subr.bf16.mxu0 0
    %1741 = vmatpush1.bf16.msra.mxu0 %v463
    %1742 = vmatprep.subr.bf16.mxu0 0
    %1743 = vmatpush1.bf16.msra.mxu0 %v464
    %1744 = vmatprep.subr.bf16.mxu0 0
    %1745 = vmatpush1.bf16.msra.mxu0 %v465
    %1746 = vmatprep.subr.bf16.mxu0 0
    %1747 = vmatpush1.bf16.msra.mxu0 %v466
    %1748 = vmatprep.subr.bf16.mxu0 0
    %1749 = vmatpush1.bf16.msra.mxu0 %v467
    %1750 = vmatprep.subr.bf16.mxu0 0
    %1751 = vmatpush1.bf16.msra.mxu0 0
    %1752 = vmatprep.subr.bf16.mxu0 0
    %1753 = vmatpush1.bf16.msra.mxu0 0
    %1754 = vmatprep.subr.bf16.mxu0 0
    %1755 = vmatpush1.bf16.msra.mxu0 0
    %1756 = vmatprep.subr.bf16.mxu0 0
    %1757 = vmatpush1.bf16.msra.mxu0 0
    %1758 = vmatprep.subr.bf16.mxu0 0
    %1759 = vmatpush1.bf16.msra.mxu0 0
    %1760 = vmatprep.subr.bf16.mxu0 0
    %1761 = vmatpush1.bf16.msra.mxu0 0
    %1762 = vmatprep.mubr.bf16.mxu0 %v1728
    %1763 = vmatmul.mubr.bf16.gmra.mrb[0].mxu0 %v1722
    %v1764 = vpop.f32.mrb[0].mxu0
    %v1765 = vadd.f32 %v100, %v1764
    %v1766 = vpop.f32.mrb[0].mxu0
    %v1767 = vpop.f32.mrb[0].mxu0
    %v1768 = vpop.f32.mrb[0].mxu0
    %1769 = vdwg.mxu0
    %v1770 = vxor.u32 %v1765, 2147483648
    %v1771 = vmul.f32 %v1770, 1.442695
    %v1772 = vpow.pop %v1771
    %v1773 = vadd.f32 %v1772, 1.0
    %v1774 = vrcp.pop %v1773
    %v1775 = vmul.f32 1.0, %v1774
    %v1776 = vtanh.pop %v1765
    %v1777 = vmul.f32 %v1775, %v1579
    %1779 = vrot.lane.b32.xlu0 %v1776, 32
    %v1780 = vpop.permute.xlu0 %1779
    %v1782 = vmul.f32 %v1775, %v1780
    %1784 = vrot.lane.b32.xlu0 %v1782, 32
    %v1785 = vpop.permute.xlu0 %1784
    %v1787 = vadd.f32 %v1777, %v1785
    %v1788 = vtanh.pop %v1787
    %1790 = vrot.lane.b32.xlu0 %v1788, 32
    %v1791 = vpop.permute.xlu0 %1790
    %v1793 = vmul.f32 %v1775, %v1791
    %s1794 = sld [smem:[#allocation2 + $0x7]]
    %v1795 = vstv %s1794
    %v1796 = vmul.f32 %v1795, %v66
    %v1797 = vadd.f32 %v1796, %v67
    %1798 = vmatprep.subr.bf16.mxu0 %v222
    %1799 = vmatpush1.bf16.msra.mxu0 %v221
    %1800 = vmatprep.subr.bf16.mxu0 %v226
    %1801 = vmatpush1.bf16.msra.mxu0 %v225
    %1802 = vmatprep.subr.bf16.mxu0 %v230
    %1803 = vmatpush1.bf16.msra.mxu0 %v229
    %1804 = vmatprep.subr.bf16.mxu0 %v234
    %1805 = vmatpush1.bf16.msra.mxu0 %v233
    %1806 = vmatprep.subr.bf16.mxu0 %v238
    %1807 = vmatpush1.bf16.msra.mxu0 %v237
    %1808 = vmatprep.subr.bf16.mxu0 %v242
    %1809 = vmatpush1.bf16.msra.mxu0 %v241
    %1810 = vmatprep.subr.bf16.mxu0 %v246
    %1811 = vmatpush1.bf16.msra.mxu0 %v245
    %1812 = vmatprep.subr.bf16.mxu0 %v250
    %1813 = vmatpush1.bf16.msra.mxu0 %v249
    %1814 = vmatprep.subr.bf16.mxu0 0
    %1815 = vmatpush1.bf16.msra.mxu0 0
    %1816 = vmatprep.subr.bf16.mxu0 0
    %1817 = vmatpush1.bf16.msra.mxu0 0
    %1818 = vmatprep.subr.bf16.mxu0 0
    %1819 = vmatpush1.bf16.msra.mxu0 0
    %1820 = vmatprep.subr.bf16.mxu0 0
    %1821 = vmatpush1.bf16.msra.mxu0 0
    %1822 = vmatprep.subr.bf16.mxu0 0
    %1823 = vmatpush1.bf16.msra.mxu0 0
    %1824 = vmatprep.subr.bf16.mxu0 0
    %1825 = vmatpush1.bf16.msra.mxu0 0
    %1826 = vmatprep.subr.bf16.mxu0 0
    %1827 = vmatpush1.bf16.msra.mxu0 0
    %1828 = vmatprep.subr.bf16.mxu0 0
    %1829 = vmatpush1.bf16.msra.mxu0 0
    %1830 = vmatprep.mubr.bf16.mxu0 0
    %1831 = vmatmul.mubr.bf16.gmra.mrb[0].mxu0 %v1722
    %v1832 = vpop.f32.mrb[0].mxu0
    %v1833 = vadd.f32 0.0, %v1832
    %v1834 = vpop.f32.mrb[0].mxu0
    %v1835 = vadd.f32 0.0, %v1834
    %v1836 = vpop.f32.mrb[0].mxu0
    %v1837 = vpop.f32.mrb[0].mxu0
    %1838 = vdwg.mxu0
    %1839 = vmatprep.subr.bf16.mxu0 %v224
    %1840 = vmatpush1.bf16.msra.mxu0 %v223
    %1841 = vmatprep.subr.bf16.mxu0 %v228
    %1842 = vmatpush1.bf16.msra.mxu0 %v227
    %1843 = vmatprep.subr.bf16.mxu0 %v232
    %1844 = vmatpush1.bf16.msra.mxu0 %v231
    %1845 = vmatprep.subr.bf16.mxu0 %v236
    %1846 = vmatpush1.bf16.msra.mxu0 %v235
    %1847 = vmatprep.subr.bf16.mxu0 %v240
    %1848 = vmatpush1.bf16.msra.mxu0 %v239
    %1849 = vmatprep.subr.bf16.mxu0 %v244
    %1850 = vmatpush1.bf16.msra.mxu0 %v243
    %1851 = vmatprep.subr.bf16.mxu0 %v248
    %1852 = vmatpush1.bf16.msra.mxu0 %v247
    %1853 = vmatprep.subr.bf16.mxu0 %v252
    %1854 = vmatpush1.bf16.msra.mxu0 %v251
    %1855 = vmatprep.subr.bf16.mxu0 0
    %1856 = vmatpush1.bf16.msra.mxu0 0
    %1857 = vmatprep.subr.bf16.mxu0 0
    %1858 = vmatpush1.bf16.msra.mxu0 0
    %1859 = vmatprep.subr.bf16.mxu0 0
    %1860 = vmatpush1.bf16.msra.mxu0 0
    %1861 = vmatprep.subr.bf16.mxu0 0
    %1862 = vmatpush1.bf16.msra.mxu0 0
    %1863 = vmatprep.subr.bf16.mxu0 0
    %1864 = vmatpush1.bf16.msra.mxu0 0
    %1865 = vmatprep.subr.bf16.mxu0 0
    %1866 = vmatpush1.bf16.msra.mxu0 0
    %1867 = vmatprep.subr.bf16.mxu0 0
    %1868 = vmatpush1.bf16.msra.mxu0 0
    %1869 = vmatprep.subr.bf16.mxu0 0
    %1870 = vmatpush1.bf16.msra.mxu0 0
    %1871 = vmatprep.mubr.bf16.mxu0 0
    %1872 = vmatmul.mubr.bf16.gmra.mrb[0].mxu0 %v1722
    %v1873 = vpop.f32.mrb[0].mxu0
    %v1874 = vadd.f32 0.0, %v1873
    %v1875 = vpop.f32.mrb[0].mxu0
    %v1876 = vadd.f32 0.0, %v1875
    %v1877 = vpop.f32.mrb[0].mxu0
    %v1878 = vpop.f32.mrb[0].mxu0
    %1879 = vdwg.mxu0
    %v1884 = vcombine.low %v1833, %v1835
    %v1885 = vcombine.low %v1874, %v1876
    %v1887 = vunpack.c.l.s4 1966171168
    %v1888 = vunpack.c.0.s8 %v1887
    %v1889 = vlaneseq
    %v1890 = vshrl.u32 %v1889, 7
    %v1891 = vsub.s32 %v1888, %v1890
    %v1892 = vrot.slane %v1884, %v1891
    %v1894 = vunpack.c.l.s4 1966171168
    %v1895 = vunpack.c.0.s8 %v1894
    %v1896 = vlaneseq
    %v1897 = vshrl.u32 %v1896, 7
    %v1898 = vsub.s32 %v1895, %v1897
    %v1899 = vrot.slane %v1885, %v1898
    %v1900 = vcombine.low %v1892, %v1899
    %v1902 = vunpack.c.l.s4 1966171168
    %v1903 = vunpack.c.0.s8 %v1902
    %v1904 = vlaneseq
    %v1905 = vshrl.u32 %v1904, 7
    %v1906 = vsub.s32 %v1903, %v1905
    %v1907 = vrot.slane %v1900, %v1906
    %v1909 = vadd.f32 %v1797, %v1907
    %v1910 = vxor.u32 %v1909, 2147483648
    %v1911 = vmul.f32 %v1910, 1.442695
    %v1912 = vpow.pop %v1911
    %v1913 = vadd.f32 %v1912, 1.0
    %v1914 = vrcp.pop %v1913
    %v1915 = vmul.f32 1.0, %v1914
    %v1917 = vrot.slane %v1909, 3
    %v1919 = vtanh.pop %v1917
    %v1921 = vrot.slane %v1915, 1
    %v1923 = vmul.f32 %v1921, %v1717
    %v1924 = vmul.f32 %v1915, %v1919
    %v1925 = vadd.f32 %v1923, %v1924
    %v1926 = vtanh.pop %v1925
    %v1927 = vrot.slane %v1915, 2
    %v1929 = vmul.f32 %v1927, %v1926
    %v1930 = vpack.c.bf16 %v1929, %v1929
    %v1931 = vpack.c.bf16 %v1793, %v1793
    %1933 = vrot.lane.b32.xlu0 %v1931, 64
    %v1934 = vpop.permute.xlu0 %1933
    %v1936 = vsel %vm478, %v1934, 0
    %1938 = vmatprep.subr.bf16.mxu0 0
    %1939 = vmatpush1.bf16.msra.mxu0 %v458
    %1940 = vmatprep.subr.bf16.mxu0 0
    %1941 = vmatpush1.bf16.msra.mxu0 %v459
    %1942 = vmatprep.subr.bf16.mxu0 0
    %1943 = vmatpush1.bf16.msra.mxu0 %v460
    %1944 = vmatprep.subr.bf16.mxu0 0
    %1945 = vmatpush1.bf16.msra.mxu0 %v461
    %1946 = vmatprep.subr.bf16.mxu0 0
    %1947 = vmatpush1.bf16.msra.mxu0 %v462
    %1948 = vmatprep.subr.bf16.mxu0 0
    %1949 = vmatpush1.bf16.msra.mxu0 %v463
    %1950 = vmatprep.subr.bf16.mxu0 0
    %1951 = vmatpush1.bf16.msra.mxu0 %v464
    %1952 = vmatprep.subr.bf16.mxu0 0
    %1953 = vmatpush1.bf16.msra.mxu0 %v465
    %1954 = vmatprep.subr.bf16.mxu0 0
    %1955 = vmatpush1.bf16.msra.mxu0 %v466
    %1956 = vmatprep.subr.bf16.mxu0 0
    %1957 = vmatpush1.bf16.msra.mxu0 %v467
    %1958 = vmatprep.subr.bf16.mxu0 0
    %1959 = vmatpush1.bf16.msra.mxu0 0
    %1960 = vmatprep.subr.bf16.mxu0 0
    %1961 = vmatpush1.bf16.msra.mxu0 0
    %1962 = vmatprep.subr.bf16.mxu0 0
    %1963 = vmatpush1.bf16.msra.mxu0 0
    %1964 = vmatprep.subr.bf16.mxu0 0
    %1965 = vmatpush1.bf16.msra.mxu0 0
    %1966 = vmatprep.subr.bf16.mxu0 0
    %1967 = vmatpush1.bf16.msra.mxu0 0
    %1968 = vmatprep.subr.bf16.mxu0 0
    %1969 = vmatpush1.bf16.msra.mxu0 0
    %1970 = vmatprep.mubr.bf16.mxu0 %v1936
    %1971 = vmatmul.mubr.bf16.gmra.mrb[0].mxu0 %v1930
    %v1972 = vpop.f32.mrb[0].mxu0
    %v1973 = vadd.f32 %v100, %v1972
    %v1974 = vpop.f32.mrb[0].mxu0
    %v1975 = vpop.f32.mrb[0].mxu0
    %v1976 = vpop.f32.mrb[0].mxu0
    %1977 = vdwg.mxu0
    %v1978 = vxor.u32 %v1973, 2147483648
    %v1979 = vmul.f32 %v1978, 1.442695
    %v1980 = vpow.pop %v1979
    %v1981 = vadd.f32 %v1980, 1.0
    %v1982 = vrcp.pop %v1981
    %v1983 = vmul.f32 1.0, %v1982
    %v1984 = vtanh.pop %v1973
    %v1985 = vmul.f32 %v1983, %v1787
    %1987 = vrot.lane.b32.xlu0 %v1984, 32
    %v1988 = vpop.permute.xlu0 %1987
    %v1990 = vmul.f32 %v1983, %v1988
    %1992 = vrot.lane.b32.xlu0 %v1990, 32
    %v1993 = vpop.permute.xlu0 %1992
    %v1995 = vadd.f32 %v1985, %v1993
    %v1996 = vtanh.pop %v1995
    %1998 = vrot.lane.b32.xlu0 %v1996, 32
    %v1999 = vpop.permute.xlu0 %1998
    %v2001 = vmul.f32 %v1983, %v1999
    %2003 = vrot.lane.b32.xlu0 %v2001, 64
    %v2004 = vpop.permute.xlu0 %2003
    %vm2006 = vcmask 253952
    %2007 = vst.msk [vmem:[#allocation9] sm:$0x1] %vm2006, %v2004
    // Predicated region
    $region38: #{encoder_forward.1} parent=1 // pred_check
      _
    $region39: #{encoder_forward.1} parent=1 // pred_check_branch
      %2009 = sbr.rel (0) target = $region41
    $region40: #{encoder_forward.1} parent=1 // pred_region
      %s2011 = ssub.s32 16, 16
      %2012 = vsyncadd [#allocation4], %s2011
      %s2014 = sshll.u32 [#allocation9], 4
      %s2015 = int_to_ptr.vmem [resolvable:$true] %s2014
      %2017 = dma.vmem_to_hbm [thread:$0]  %s2015, 16, %s6, [#allocation4]
    $region41: #{encoder_forward.1} parent=1 // pred_fallthru
      _
    // Predicated region
    $region42: #{encoder_forward.1} parent=1 // pred_check
      _
    $region43: #{encoder_forward.1} parent=1 // pred_check_branch
      %2019 = sbr.rel (0) target = $region45
    $region44: #{encoder_forward.1} parent=1 // pred_region
      %2020 = dma.done [#allocation4], 16
    $region45: #{encoder_forward.1} parent=1 // pred_fallthru
      _
    %2021 = vsyncpa [#allocation3], 1
    %2022 = vsyncpa [#allocation8], 1
    %2023 = vsyncpa [#allocation4], 1
    %2024 = vsyncpa [#allocation5], 1

</llo_original>
